<compile_context>
chip_gen: v7x
topology: tpu7x:2x2x1
jax: 0.10.0
libtpu: 0.0.40
codegen_flags: <defaults>
</compile_context>

<pallas_src>
import jax
import jax.numpy as jnp
from jax.experimental import pallas as pl
from jax.experimental.pallas import tpu as pltpu

K_PAD = 8        # fc1 contraction dim padded 6 -> 8
HID3_PAD = 128   # fc3 hidden width padded 64 -> 128 (lane-dense)
OUT_PAD = 128    # fcf output dim padded 3 -> 128 (lane-dense stores)
SUB = 16         # row alignment (bf16 sublane tile)
MAX_TB = 2048    # max batch tile (multiple of SUB)


def _round_up(x, m):
    return (x + m - 1) // m * m


def _cdiv(a, b):
    return -(-a // b)


def _tile_plan(B):
    """Pick (TB, B_pad, n_steps): >=2 grid steps (v7x megacore), TB <= MAX_TB,
    TB a multiple of SUB, B_pad = n_steps * TB."""
    B_aligned = _round_up(B, SUB)
    n_steps = max(2, _cdiv(B_aligned, MAX_TB))
    TB = _round_up(_cdiv(B_aligned, n_steps), SUB)
    B_pad = n_steps * TB
    return TB, B_pad, n_steps


def mlp_kernel(x_ref,
               w1_ref, b1_ref,
               w2_ref, b2_ref,
               w3_ref, b3_ref,
               w4_ref, b4_ref,
               o_ref):
    # x block: (TB, 8) f32. Weights & biases bf16. MXU accumulation in f32,
    # bias + ReLU epilogues in bf16, output stored bf16 (lane-dense).
    x = x_ref[...].astype(jnp.bfloat16)

    h1 = jnp.dot(x, w1_ref[...], preferred_element_type=jnp.float32)
    h1 = jnp.maximum(h1.astype(jnp.bfloat16) + b1_ref[...], 0)

    h2 = jnp.dot(h1, w2_ref[...], preferred_element_type=jnp.float32)
    h2 = jnp.maximum(h2.astype(jnp.bfloat16) + b2_ref[...], 0)

    h3 = jnp.dot(h2, w3_ref[...], preferred_element_type=jnp.float32)
    h3 = jnp.maximum(h3.astype(jnp.bfloat16) + b3_ref[...], 0)

    out = jnp.dot(h3, w4_ref[...], preferred_element_type=jnp.float32)
    o_ref[...] = out.astype(jnp.bfloat16) + b4_ref[...]


def net_forward(x, kp):
    """x: (B, 6) float32. kp: prepared (padded / bf16) kernel params.
    Returns (B, 3) float32."""
    B = x.shape[0]
    TB, B_pad, n_steps = _tile_plan(B)

    # Pad batch to n_steps * TB and contraction dim 6 -> 8 with zeros.
    x_p = jnp.zeros((B_pad, K_PAD), jnp.float32).at[:B, :6].set(
        x.astype(jnp.float32))

    const = lambda i: (0, 0)  # weights/biases: same block every grid step

    flops = 2 * B_pad * (K_PAD * 512 + 512 * 512 + 512 * HID3_PAD
                         + HID3_PAD * OUT_PAD)
    bytes_accessed = int(
        x_p.size * 4 + B_pad * OUT_PAD * 2
        + sum(int(v.size) * v.dtype.itemsize for v in kp.values()))

    out = pl.pallas_call(
        mlp_kernel,
        out_shape=jax.ShapeDtypeStruct((B_pad, OUT_PAD), jnp.bfloat16),
        grid=(n_steps,),
        in_specs=[
            pl.BlockSpec((TB, K_PAD), lambda i: (i, 0)),    # x tile
            pl.BlockSpec((K_PAD, 512), const),              # w1
            pl.BlockSpec((1, 512), const),                  # b1
            pl.BlockSpec((512, 512), const),                # w2
            pl.BlockSpec((1, 512), const),                  # b2
            pl.BlockSpec((512, HID3_PAD), const),           # w3 (padded cols)
            pl.BlockSpec((1, HID3_PAD), const),             # b3 (padded)
            pl.BlockSpec((HID3_PAD, OUT_PAD), const),       # w4 (padded)
            pl.BlockSpec((1, OUT_PAD), const),              # b4 (padded)
        ],
        out_specs=pl.BlockSpec((TB, OUT_PAD), lambda i: (i, 0)),
        compiler_params=pltpu.CompilerParams(
            dimension_semantics=("parallel",),
            vmem_limit_bytes=40 * 1024 * 1024),
        cost_estimate=pl.CostEstimate(
            flops=flops, transcendentals=0, bytes_accessed=bytes_accessed),
    )(x_p,
      kp["w1"], kp["b1"],
      kp["w2"], kp["b2"],
      kp["w3"], kp["b3"],
      kp["w4"], kp["b4"])

    return out[:B, :3].astype(jnp.float32)


def init_params(key):
    """PyTorch-like nn.Linear init (uniform +-1/sqrt(fan_in)), f32, unpadded.
    Weights are (in, out); biases are (1, out)."""
    dims = [(6, 512), (512, 512), (512, 64), (64, 3)]
    params = {}
    for i, (fan_in, fan_out) in enumerate(dims, start=1):
        key, kw, kb = jax.random.split(key, 3)
        bound = 1.0 / jnp.sqrt(jnp.float32(fan_in))
        params[f"w{i}"] = jax.random.uniform(
            kw, (fan_in, fan_out), jnp.float32, minval=-bound, maxval=bound)
        params[f"b{i}"] = jax.random.uniform(
            kb, (1, fan_out), jnp.float32, minval=-bound, maxval=bound)
    return params


def prepare_params(raw):
    """Zero-pad fc1 K 6->8, fc3 width 64->128, fcf out 3->128; cast to bf16.
    Padded rows/cols are zero so results are unchanged."""
    kp = {}
    w1 = jnp.zeros((K_PAD, 512), jnp.float32).at[:6, :].set(raw["w1"])
    kp["w1"] = w1.astype(jnp.bfloat16)
    kp["b1"] = raw["b1"].astype(jnp.bfloat16)

    kp["w2"] = raw["w2"].astype(jnp.bfloat16)
    kp["b2"] = raw["b2"].astype(jnp.bfloat16)

    w3 = jnp.zeros((512, HID3_PAD), jnp.float32).at[:, :64].set(raw["w3"])
    kp["w3"] = w3.astype(jnp.bfloat16)
    b3 = jnp.zeros((1, HID3_PAD), jnp.float32).at[:, :64].set(raw["b3"])
    kp["b3"] = b3.astype(jnp.bfloat16)

    w4 = jnp.zeros((HID3_PAD, OUT_PAD), jnp.float32).at[:64, :3].set(raw["w4"])
    kp["w4"] = w4.astype(jnp.bfloat16)
    b4 = jnp.zeros((1, OUT_PAD), jnp.float32).at[:, :3].set(raw["b4"])
    kp["b4"] = b4.astype(jnp.bfloat16)
    return kp


def net_reference(x, params):
    h = jnp.maximum(x @ params["w1"] + params["b1"], 0.0)
    h = jnp.maximum(h @ params["w2"] + params["b2"], 0.0)
    h = jnp.maximum(h @ params["w3"] + params["b3"], 0.0)
    return h @ params["w4"] + params["b4"]


if __name__ == "__main__":
    key = jax.random.PRNGKey(0)
    key, kx, kx2 = jax.random.split(key, 3)

    raw_params = init_params(key)
    kernel_params = prepare_params(raw_params)

    # Small batch (exercises the min-2-step tile plan with tiny tiles).
    B = 8
    x = jax.random.normal(kx, (B, 6), jnp.float32)
    out = jax.block_until_ready(net_forward(x, kernel_params))
    ref = net_reference(x, raw_params)
    assert out.shape == (B, 3), out.shape
    assert jnp.allclose(out, ref, atol=3e-2, rtol=3e-2), "mismatch vs reference"

    # Larger, non-multiple batch to exercise the tiled grid + tail padding.
    B2 = 1032
    x2 = jax.random.normal(kx2, (B2, 6), jnp.float32)
    out2 = jax.block_until_ready(net_forward(x2, kernel_params))
    ref2 = net_reference(x2, raw_params)
    assert out2.shape == (B2, 3), out2.shape
    assert jnp.allclose(out2, ref2, atol=3e-2, rtol=3e-2), \
        "mismatch vs reference (tiled)"

    print("KERNEL_OK")
</pallas_src>

<mosaic_0001>
module attributes {stable_mosaic.version = 11 : i64} {
  func.func @mlp_kernel(%arg0: i32, %arg1: memref<16x8xf32, #tpu.memory_space<vmem>>, %arg2: memref<8x512xbf16, #tpu.memory_space<vmem>>, %arg3: memref<1x512xbf16, #tpu.memory_space<vmem>>, %arg4: memref<512x512xbf16, #tpu.memory_space<vmem>>, %arg5: memref<1x512xbf16, #tpu.memory_space<vmem>>, %arg6: memref<512x128xbf16, #tpu.memory_space<vmem>>, %arg7: memref<1x128xbf16, #tpu.memory_space<vmem>>, %arg8: memref<128x128xbf16, #tpu.memory_space<vmem>>, %arg9: memref<1x128xbf16, #tpu.memory_space<vmem>>, %arg10: memref<16x128xbf16, #tpu.memory_space<vmem>>) attributes {dimension_semantics = [#tpu.dimension_semantics<parallel>], iteration_bounds = array<i64: 2>, scalar_prefetch = 0 : i64, scratch_operands = 0 : i64, tpu.core_type = #tpu.core_type<tc>, window_params = [{transform_indices = @transform_0, window_bounds = array<i64: 16, 8>}, {pipeline_mode = #tpu.pipeline_mode<synchronous>, transform_indices = @transform_1, window_bounds = array<i64: 8, 512>}, {pipeline_mode = #tpu.pipeline_mode<synchronous>, transform_indices = @transform_2, window_bounds = array<i64: 1, 512>}, {pipeline_mode = #tpu.pipeline_mode<synchronous>, transform_indices = @transform_3, window_bounds = array<i64: 512, 512>}, {pipeline_mode = #tpu.pipeline_mode<synchronous>, transform_indices = @transform_4, window_bounds = array<i64: 1, 512>}, {pipeline_mode = #tpu.pipeline_mode<synchronous>, transform_indices = @transform_5, window_bounds = array<i64: 512, 128>}, {pipeline_mode = #tpu.pipeline_mode<synchronous>, transform_indices = @transform_6, window_bounds = array<i64: 1, 128>}, {pipeline_mode = #tpu.pipeline_mode<synchronous>, transform_indices = @transform_7, window_bounds = array<i64: 128, 128>}, {pipeline_mode = #tpu.pipeline_mode<synchronous>, transform_indices = @transform_8, window_bounds = array<i64: 1, 128>}, {transform_indices = @transform_9, window_bounds = array<i64: 16, 128>}]} {
    %c0 = arith.constant 0 : index
    %c0_0 = arith.constant 0 : index
    %0 = vector.load %arg1[%c0, %c0_0] : memref<16x8xf32, #tpu.memory_space<vmem>>, vector<16x8xf32>
    %1 = arith.truncf %0 : vector<16x8xf32> to vector<16x8xbf16>
    %c0_1 = arith.constant 0 : index
    %c0_2 = arith.constant 0 : index
    %2 = vector.load %arg2[%c0_1, %c0_2] : memref<8x512xbf16, #tpu.memory_space<vmem>>, vector<8x512xbf16>
    %cst = arith.constant dense<0.000000e+00> : vector<16x512xf32>
    %3 = tpu.matmul %1, %2, %cst {dimension_numbers = #tpu.dot_dimension_numbers<[1], [0], [0], [1], [0, 0, 1, 1], [], []>} : vector<16x8xbf16>, vector<8x512xbf16>, vector<16x512xf32> -> vector<16x512xf32>
    %4 = arith.truncf %3 : vector<16x512xf32> to vector<16x512xbf16>
    %c0_3 = arith.constant 0 : index
    %c0_4 = arith.constant 0 : index
    %5 = vector.load %arg3[%c0_3, %c0_4] : memref<1x512xbf16, #tpu.memory_space<vmem>>, vector<1x512xbf16>
    %6 = vector.broadcast %5 : vector<1x512xbf16> to vector<16x512xbf16>
    %7 = arith.addf %4, %6 : vector<16x512xbf16>
    %cst_5 = arith.constant 0.000000e+00 : bf16
    %8 = vector.broadcast %cst_5 : bf16 to vector<16x512xbf16>
    %9 = arith.maximumf %7, %8 : vector<16x512xbf16>
    %c0_6 = arith.constant 0 : index
    %c0_7 = arith.constant 0 : index
    %10 = vector.load %arg4[%c0_6, %c0_7] : memref<512x512xbf16, #tpu.memory_space<vmem>>, vector<512x512xbf16>
    %cst_8 = arith.constant dense<0.000000e+00> : vector<16x512xf32>
    %11 = tpu.matmul %9, %10, %cst_8 {dimension_numbers = #tpu.dot_dimension_numbers<[1], [0], [0], [1], [0, 0, 1, 1], [], []>} : vector<16x512xbf16>, vector<512x512xbf16>, vector<16x512xf32> -> vector<16x512xf32>
    %12 = arith.truncf %11 : vector<16x512xf32> to vector<16x512xbf16>
    %c0_9 = arith.constant 0 : index
    %c0_10 = arith.constant 0 : index
    %13 = vector.load %arg5[%c0_9, %c0_10] : memref<1x512xbf16, #tpu.memory_space<vmem>>, vector<1x512xbf16>
    %14 = vector.broadcast %13 : vector<1x512xbf16> to vector<16x512xbf16>
    %15 = arith.addf %12, %14 : vector<16x512xbf16>
    %cst_11 = arith.constant 0.000000e+00 : bf16
    %16 = vector.broadcast %cst_11 : bf16 to vector<16x512xbf16>
    %17 = arith.maximumf %15, %16 : vector<16x512xbf16>
    %c0_12 = arith.constant 0 : index
    %c0_13 = arith.constant 0 : index
    %18 = vector.load %arg6[%c0_12, %c0_13] : memref<512x128xbf16, #tpu.memory_space<vmem>>, vector<512x128xbf16>
    %cst_14 = arith.constant dense<0.000000e+00> : vector<16x128xf32>
    %19 = tpu.matmul %17, %18, %cst_14 {dimension_numbers = #tpu.dot_dimension_numbers<[1], [0], [0], [1], [0, 0, 1, 1], [], []>} : vector<16x512xbf16>, vector<512x128xbf16>, vector<16x128xf32> -> vector<16x128xf32>
    %20 = arith.truncf %19 : vector<16x128xf32> to vector<16x128xbf16>
    %c0_15 = arith.constant 0 : index
    %c0_16 = arith.constant 0 : index
    %21 = vector.load %arg7[%c0_15, %c0_16] : memref<1x128xbf16, #tpu.memory_space<vmem>>, vector<1x128xbf16>
    %22 = vector.broadcast %21 : vector<1x128xbf16> to vector<16x128xbf16>
    %23 = arith.addf %20, %22 : vector<16x128xbf16>
    %cst_17 = arith.constant 0.000000e+00 : bf16
    %24 = vector.broadcast %cst_17 : bf16 to vector<16x128xbf16>
    %25 = arith.maximumf %23, %24 : vector<16x128xbf16>
    %c0_18 = arith.constant 0 : index
    %c0_19 = arith.constant 0 : index
    %26 = vector.load %arg8[%c0_18, %c0_19] : memref<128x128xbf16, #tpu.memory_space<vmem>>, vector<128x128xbf16>
    %cst_20 = arith.constant dense<0.000000e+00> : vector<16x128xf32>
    %27 = tpu.matmul %25, %26, %cst_20 {dimension_numbers = #tpu.dot_dimension_numbers<[1], [0], [0], [1], [0, 0, 1, 1], [], []>} : vector<16x128xbf16>, vector<128x128xbf16>, vector<16x128xf32> -> vector<16x128xf32>
    %28 = arith.truncf %27 : vector<16x128xf32> to vector<16x128xbf16>
    %c0_21 = arith.constant 0 : index
    %c0_22 = arith.constant 0 : index
    %29 = vector.load %arg9[%c0_21, %c0_22] : memref<1x128xbf16, #tpu.memory_space<vmem>>, vector<1x128xbf16>
    %30 = vector.broadcast %29 : vector<1x128xbf16> to vector<16x128xbf16>
    %31 = arith.addf %28, %30 : vector<16x128xbf16>
    %c0_23 = arith.constant 0 : index
    %c0_24 = arith.constant 0 : index
    %32 = vector.load %arg10[%c0_23, %c0_24] : memref<16x128xbf16, #tpu.memory_space<vmem>>, vector<16x128xbf16>
    tpu.vector_store %arg10[%c0_23, %c0_24], %31 {strides = array<i32>} : memref<16x128xbf16, #tpu.memory_space<vmem>>, vector<16x128xbf16>,
    return
  }
  func.func @transform_0(%arg0: i32) -> (i32, i32) {
    %c0_i32 = arith.constant 0 : i32
    %c0_i32_0 = arith.constant 0 : i32
    return %arg0, %c0_i32 : i32, i32
  }
  func.func @transform_1(%arg0: i32) -> (i32, i32) {
    %c0_i32 = arith.constant 0 : i32
    %c0_i32_0 = arith.constant 0 : i32
    %c0_i32_1 = arith.constant 0 : i32
    return %c0_i32, %c0_i32_0 : i32, i32
  }
  func.func @transform_2(%arg0: i32) -> (i32, i32) {
    %c0_i32 = arith.constant 0 : i32
    %c0_i32_0 = arith.constant 0 : i32
    %c0_i32_1 = arith.constant 0 : i32
    return %c0_i32, %c0_i32_0 : i32, i32
  }
  func.func @transform_3(%arg0: i32) -> (i32, i32) {
    %c0_i32 = arith.constant 0 : i32
    %c0_i32_0 = arith.constant 0 : i32
    %c0_i32_1 = arith.constant 0 : i32
    return %c0_i32, %c0_i32_0 : i32, i32
  }
  func.func @transform_4(%arg0: i32) -> (i32, i32) {
    %c0_i32 = arith.constant 0 : i32
    %c0_i32_0 = arith.constant 0 : i32
    %c0_i32_1 = arith.constant 0 : i32
    return %c0_i32, %c0_i32_0 : i32, i32
  }
  func.func @transform_5(%arg0: i32) -> (i32, i32) {
    %c0_i32 = arith.constant 0 : i32
    %c0_i32_0 = arith.constant 0 : i32
    %c0_i32_1 = arith.constant 0 : i32
    return %c0_i32, %c0_i32_0 : i32, i32
  }
  func.func @transform_6(%arg0: i32) -> (i32, i32) {
    %c0_i32 = arith.constant 0 : i32
    %c0_i32_0 = arith.constant 0 : i32
    %c0_i32_1 = arith.constant 0 : i32
    return %c0_i32, %c0_i32_0 : i32, i32
  }
  func.func @transform_7(%arg0: i32) -> (i32, i32) {
    %c0_i32 = arith.constant 0 : i32
    %c0_i32_0 = arith.constant 0 : i32
    %c0_i32_1 = arith.constant 0 : i32
    return %c0_i32, %c0_i32_0 : i32, i32
  }
  func.func @transform_8(%arg0: i32) -> (i32, i32) {
    %c0_i32 = arith.constant 0 : i32
    %c0_i32_0 = arith.constant 0 : i32
    %c0_i32_1 = arith.constant 0 : i32
    return %c0_i32, %c0_i32_0 : i32, i32
  }
  func.func @transform_9(%arg0: i32) -> (i32, i32) {
    %c0_i32 = arith.constant 0 : i32
    %c0_i32_0 = arith.constant 0 : i32
    return %arg0, %c0_i32 : i32, i32
  }
}

</mosaic_0001>

<llo_original>
// kernel: tpu_custom_call.1
$region0: #{tpu_custom_call.1}
  #allocation0 [shape = 'u32[]', space=smem, size = 0x4, offset = 0x4, fixed_abs, tag = 'smem constant byte address 0x4 - core index']
  #allocation1 [shape = 'u32[144,128]{1,0:T(1,128)}', space=vmem, size = 0x12000, scoped, tag = 'internal scratch']
  %s0 = inlined_call_operand.vmem [shape: f32[32,8], index: 0, kind: input, shape index: {}]
  %s1 = inlined_call_operand.hbm [shape: bf16[8,512], index: 1, kind: input, shape index: {}]
  %s2 = inlined_call_operand.hbm [shape: bf16[1,512], index: 2, kind: input, shape index: {}]
  %s3 = inlined_call_operand.hbm [shape: bf16[512,512], index: 3, kind: input, shape index: {}]
  %s4 = inlined_call_operand.hbm [shape: bf16[1,512], index: 4, kind: input, shape index: {}]
  %s5 = inlined_call_operand.hbm [shape: bf16[512,128], index: 5, kind: input, shape index: {}]
  %s6 = inlined_call_operand.vmem [shape: bf16[1,128], index: 6, kind: input, shape index: {}]
  %s7 = inlined_call_operand.vmem [shape: bf16[128,128], index: 7, kind: input, shape index: {}]
  %s8 = inlined_call_operand.vmem [shape: bf16[1,128], index: 8, kind: input, shape index: {}]
  %s9 = inlined_call_operand.hbm [shape: bf16[32,128], index: 9, kind: output, shape index: {}]
  %s10 = sld [smem:[#allocation0]]
  $region89: #{tpu_custom_call.1} parent=0
    _
  %s12 = ssub.s32 1, %s10
  %s13 = scalar_select 0, %s12, %s10
  $region1: #{tpu_custom_call.1} parent=0
    #allocation2 [shape = 'u8[8192]{0}', space=vmem, size = 0x2000, scoped, tag = 'input window, operand 1, single buffered']
    #allocation3 [shape = 's32[2]{0}', space=sflag, size = 0x8, scoped, tag = 'scoped memory for tpu_custom_call.1']
    #allocation4 [shape = 's32[2]{0}', space=sflag, size = 0x8, scoped, tag = 'scoped memory for tpu_custom_call.1']
    #allocation5 [shape = 'u8[2048]{0}', space=vmem, size = 0x800, scoped, tag = 'input window, operand 2, single buffered']
    #allocation6 [shape = 's32[1]{0}', space=sflag, size = 0x4, scoped, tag = 'scoped memory for tpu_custom_call.1']
    #allocation7 [shape = 'u8[524288]{0}', space=vmem, size = 0x80000, scoped, tag = 'input window, operand 3, single buffered']
    #allocation8 [shape = 'u8[2048]{0}', space=vmem, size = 0x800, scoped, tag = 'input window, operand 4, single buffered']
    #allocation9 [shape = 's32[1]{0}', space=sflag, size = 0x4, scoped, tag = 'scoped memory for tpu_custom_call.1']
    #allocation10 [shape = 'u8[131072]{0}', space=vmem, size = 0x20000, scoped, tag = 'input window, operand 5, single buffered']
    #allocation11 [shape = 'u8[8192]{0}', space=vmem, size = 0x2000, scoped, tag = 'output window, operand 0']
    %14 = vsyncpa [#allocation3], 0
    %15 = vsyncpa [#allocation6], 0
    %16 = vsyncpa [#allocation9], 0
    %17 = vsyncpa [#allocation4], 0
    %s18 = scalar_lea.sflag [#allocation4], 1
    %19 = vsyncpa %s18, 0
    loop: start=0, step=1, limit=4
    $region2: #{tpu_custom_call.1} parent=1 // loop_pre_header
      _
    $region3: #{tpu_custom_call.1} parent=1 // loop_header
      %s21 = sphi 0, %s25
      %p22 = scmp.ge.s32.totalorder %s21, 4
      %s31 = sphi 0, %s33
      %s34 = sphi 0, %s31
      %s35 = sphi 0, %s34
      %s51 = sphi 0, %s35
      %s55 = sphi 0, %s55
      %s57 = sphi 0, %s55
      %s58 = sphi 0, %s57
      %s72 = sphi 0, %s58
      %s76 = sphi 0, %s76
      %s78 = sphi 0, %s76
      %s79 = sphi 0, %s78
      %s93 = sphi 0, %s79
      %s97 = sphi 0, %s97
      %s99 = sphi 0, %s97
      %s100 = sphi 0, %s99
      %s114 = sphi 0, %s100
      %s118 = sphi 0, %s118
      %s120 = sphi 0, %s118
      %s121 = sphi 0, %s120
      %s135 = sphi 0, %s121
      %s139 = sphi 0, %s139
      %s141 = sphi 0, %s139
      %s142 = sphi 0, %s141
      %s156 = sphi 0, %s142
      %s160 = sphi 0, %s160
      %s162 = sphi 0, %s160
      %s163 = sphi 0, %s162
      %s177 = sphi 0, %s163
      %s181 = sphi 0, %s181
      %s183 = sphi 0, %s181
      %s184 = sphi 0, %s183
      %s198 = sphi 0, %s184
      %s202 = sphi 0, %s202
      %s204 = sphi 0, %s202
      %s205 = sphi 0, %s204
      %s219 = sphi 0, %s205
      %s225 = sphi 0, %s227
      %s228 = sphi 0, %s225
      %s229 = sphi 0, %s228
      %s245 = sphi 0, %s229
    $region4: #{tpu_custom_call.1} parent=1 // loop_header_branch
      %24 = sbr.rel (%p22) target = $region8
    $region5: #{tpu_custom_call.1} parent=1 // loop_body
      %s26 = ssub.s32 %s21, 1
      %s27 = ssub.s32 %s21, 2
      %s28 = sadd.s32 %s21, 1
      %s29 = ssub.s32 %s21, %s28
      %p30 = scmp.eq.s32.totalorder %s29, 0
      %s32 = sadd.s32 %s31, 1
      %s33 = scalar_select %p30, %s31, %s32
      %p36 = pneg %p30
      %p37 = scmp.eq.s32.totalorder %s21, 1
      %p38 = por %p36, %p37
      %p39 = scmp.ne.s32.totalorder %s31, %s34
      %p40 = scmp.eq.s32.totalorder %s21, 0
      %p41 = por %p39, %p40
      %p42 = scmp.ne.s32.totalorder %s31, %s34
      %p43 = scmp.eq.s32.totalorder %s26, 1
      %p44 = por %p42, %p43
      %p45 = scmp.ne.s32.totalorder %s34, %s35
      %p46 = scmp.eq.s32.totalorder %s26, 0
      %p47 = por %p45, %p46
      %p48 = scmp.ne.s32.totalorder %s34, %s35
      %p49 = scmp.eq.s32.totalorder %s27, 1
      %p50 = por %p48, %p49
      %p52 = scmp.ne.s32.totalorder %s35, %s51
      %p53 = scmp.eq.s32.totalorder %s27, 0
      %p54 = por %p52, %p53
      %s56 = sadd.s32 %s55, 1
      %p59 = scmp.eq.s32.totalorder %s21, 1
      %p60 = scmp.ne.s32.totalorder %s55, %s57
      %p61 = scmp.eq.s32.totalorder %s21, 0
      %p62 = por %p60, %p61
      %p63 = scmp.ne.s32.totalorder %s55, %s57
      %p64 = scmp.eq.s32.totalorder %s26, 1
      %p65 = por %p63, %p64
      %p66 = scmp.ne.s32.totalorder %s57, %s58
      %p67 = scmp.eq.s32.totalorder %s26, 0
      %p68 = por %p66, %p67
      %p69 = scmp.ne.s32.totalorder %s57, %s58
      %p70 = scmp.eq.s32.totalorder %s27, 1
      %p71 = por %p69, %p70
      %p73 = scmp.ne.s32.totalorder %s58, %s72
      %p74 = scmp.eq.s32.totalorder %s27, 0
      %p75 = por %p73, %p74
      %s77 = sadd.s32 %s76, 1
      %p80 = scmp.eq.s32.totalorder %s21, 1
      %p81 = scmp.ne.s32.totalorder %s76, %s78
      %p82 = scmp.eq.s32.totalorder %s21, 0
      %p83 = por %p81, %p82
      %p84 = scmp.ne.s32.totalorder %s76, %s78
      %p85 = scmp.eq.s32.totalorder %s26, 1
      %p86 = por %p84, %p85
      %p87 = scmp.ne.s32.totalorder %s78, %s79
      %p88 = scmp.eq.s32.totalorder %s26, 0
      %p89 = por %p87, %p88
      %p90 = scmp.ne.s32.totalorder %s78, %s79
      %p91 = scmp.eq.s32.totalorder %s27, 1
      %p92 = por %p90, %p91
      %p94 = scmp.ne.s32.totalorder %s79, %s93
      %p95 = scmp.eq.s32.totalorder %s27, 0
      %p96 = por %p94, %p95
      %s98 = sadd.s32 %s97, 1
      %p101 = scmp.eq.s32.totalorder %s21, 1
      %p102 = scmp.ne.s32.totalorder %s97, %s99
      %p103 = scmp.eq.s32.totalorder %s21, 0
      %p104 = por %p102, %p103
      %p105 = scmp.ne.s32.totalorder %s97, %s99
      %p106 = scmp.eq.s32.totalorder %s26, 1
      %p107 = por %p105, %p106
      %p108 = scmp.ne.s32.totalorder %s99, %s100
      %p109 = scmp.eq.s32.totalorder %s26, 0
      %p110 = por %p108, %p109
      %p111 = scmp.ne.s32.totalorder %s99, %s100
      %p112 = scmp.eq.s32.totalorder %s27, 1
      %p113 = por %p111, %p112
      %p115 = scmp.ne.s32.totalorder %s100, %s114
      %p116 = scmp.eq.s32.totalorder %s27, 0
      %p117 = por %p115, %p116
      %s119 = sadd.s32 %s118, 1
      %p122 = scmp.eq.s32.totalorder %s21, 1
      %p123 = scmp.ne.s32.totalorder %s118, %s120
      %p124 = scmp.eq.s32.totalorder %s21, 0
      %p125 = por %p123, %p124
      %p126 = scmp.ne.s32.totalorder %s118, %s120
      %p127 = scmp.eq.s32.totalorder %s26, 1
      %p128 = por %p126, %p127
      %p129 = scmp.ne.s32.totalorder %s120, %s121
      %p130 = scmp.eq.s32.totalorder %s26, 0
      %p131 = por %p129, %p130
      %p132 = scmp.ne.s32.totalorder %s120, %s121
      %p133 = scmp.eq.s32.totalorder %s27, 1
      %p134 = por %p132, %p133
      %p136 = scmp.ne.s32.totalorder %s121, %s135
      %p137 = scmp.eq.s32.totalorder %s27, 0
      %p138 = por %p136, %p137
      %s140 = sadd.s32 %s139, 1
      %p143 = scmp.eq.s32.totalorder %s21, 1
      %p144 = scmp.ne.s32.totalorder %s139, %s141
      %p145 = scmp.eq.s32.totalorder %s21, 0
      %p146 = por %p144, %p145
      %p147 = scmp.ne.s32.totalorder %s139, %s141
      %p148 = scmp.eq.s32.totalorder %s26, 1
      %p149 = por %p147, %p148
      %p150 = scmp.ne.s32.totalorder %s141, %s142
      %p151 = scmp.eq.s32.totalorder %s26, 0
      %p152 = por %p150, %p151
      %p153 = scmp.ne.s32.totalorder %s141, %s142
      %p154 = scmp.eq.s32.totalorder %s27, 1
      %p155 = por %p153, %p154
      %p157 = scmp.ne.s32.totalorder %s142, %s156
      %p158 = scmp.eq.s32.totalorder %s27, 0
      %p159 = por %p157, %p158
      %s161 = sadd.s32 %s160, 1
      %p164 = scmp.eq.s32.totalorder %s21, 1
      %p165 = scmp.ne.s32.totalorder %s160, %s162
      %p166 = scmp.eq.s32.totalorder %s21, 0
      %p167 = por %p165, %p166
      %p168 = scmp.ne.s32.totalorder %s160, %s162
      %p169 = scmp.eq.s32.totalorder %s26, 1
      %p170 = por %p168, %p169
      %p171 = scmp.ne.s32.totalorder %s162, %s163
      %p172 = scmp.eq.s32.totalorder %s26, 0
      %p173 = por %p171, %p172
      %p174 = scmp.ne.s32.totalorder %s162, %s163
      %p175 = scmp.eq.s32.totalorder %s27, 1
      %p176 = por %p174, %p175
      %p178 = scmp.ne.s32.totalorder %s163, %s177
      %p179 = scmp.eq.s32.totalorder %s27, 0
      %p180 = por %p178, %p179
      %s182 = sadd.s32 %s181, 1
      %p185 = scmp.eq.s32.totalorder %s21, 1
      %p186 = scmp.ne.s32.totalorder %s181, %s183
      %p187 = scmp.eq.s32.totalorder %s21, 0
      %p188 = por %p186, %p187
      %p189 = scmp.ne.s32.totalorder %s181, %s183
      %p190 = scmp.eq.s32.totalorder %s26, 1
      %p191 = por %p189, %p190
      %p192 = scmp.ne.s32.totalorder %s183, %s184
      %p193 = scmp.eq.s32.totalorder %s26, 0
      %p194 = por %p192, %p193
      %p195 = scmp.ne.s32.totalorder %s183, %s184
      %p196 = scmp.eq.s32.totalorder %s27, 1
      %p197 = por %p195, %p196
      %p199 = scmp.ne.s32.totalorder %s184, %s198
      %p200 = scmp.eq.s32.totalorder %s27, 0
      %p201 = por %p199, %p200
      %s203 = sadd.s32 %s202, 1
      %p206 = scmp.eq.s32.totalorder %s21, 1
      %p207 = scmp.ne.s32.totalorder %s202, %s204
      %p208 = scmp.eq.s32.totalorder %s21, 0
      %p209 = por %p207, %p208
      %p210 = scmp.ne.s32.totalorder %s202, %s204
      %p211 = scmp.eq.s32.totalorder %s26, 1
      %p212 = por %p210, %p211
      %p213 = scmp.ne.s32.totalorder %s204, %s205
      %p214 = scmp.eq.s32.totalorder %s26, 0
      %p215 = por %p213, %p214
      %p216 = scmp.ne.s32.totalorder %s204, %s205
      %p217 = scmp.eq.s32.totalorder %s27, 1
      %p218 = por %p216, %p217
      %p220 = scmp.ne.s32.totalorder %s205, %s219
      %p221 = scmp.eq.s32.totalorder %s27, 0
      %p222 = por %p220, %p221
      %s223 = ssub.s32 %s21, %s28
      %p224 = scmp.eq.s32.totalorder %s223, 0
      %s226 = sadd.s32 %s225, 1
      %s227 = scalar_select %p224, %s225, %s226
      %p230 = pneg %p224
      %p231 = scmp.eq.s32.totalorder %s21, 1
      %p232 = por %p230, %p231
      %p233 = scmp.ne.s32.totalorder %s225, %s228
      %p234 = scmp.eq.s32.totalorder %s21, 0
      %p235 = por %p233, %p234
      %p236 = scmp.ne.s32.totalorder %s225, %s228
      %p237 = scmp.eq.s32.totalorder %s26, 1
      %p238 = por %p236, %p237
      %p239 = scmp.ne.s32.totalorder %s228, %s229
      %p240 = scmp.eq.s32.totalorder %s26, 0
      %p241 = por %p239, %p240
      %p242 = scmp.ne.s32.totalorder %s228, %s229
      %p243 = scmp.eq.s32.totalorder %s27, 1
      %p244 = por %p242, %p243
      %p246 = scmp.ne.s32.totalorder %s229, %s245
      %p247 = scmp.eq.s32.totalorder %s27, 0
      %p248 = por %p246, %p247
      %p249 = scmp.le.s32.totalorder 1, %s21
      %p250 = scmp.lt.s32.totalorder %s21, 3
      %p251 = pnand %p249, %p250
      %p252 = pneg %p251
      // Predicated region
      $region9: #{tpu_custom_call.1} parent=5 // pred_check
        _
      $region10: #{tpu_custom_call.1} parent=5 // pred_check_branch
        %254 = sbr.rel (%p251) target = $region12
      $region11: #{tpu_custom_call.1} parent=5 // pred_region
        %s255 = ssub.s32 %s21, 1
        // Predicated region
        $region13: #{tpu_custom_call.1} parent=11 // pred_check
          %p256 = pneg %p68
        $region14: #{tpu_custom_call.1} parent=11 // pred_check_branch
          %258 = sbr.rel (%p256) target = $region16
        $region15: #{tpu_custom_call.1} parent=11 // pred_region
          %s260 = ssub.s32 256, 256
          %261 = vsyncadd [#allocation3], %s260
          %s263 = sshll.u32 [#allocation2], 4
          %s264 = int_to_ptr.vmem [resolvable:$true] %s263
          %266 = dma.hbm_to_vmem [thread:$0]  %s1, 256, %s264, [#allocation3]
        $region16: #{tpu_custom_call.1} parent=11 // pred_fallthru
          _
        // Predicated region
        $region17: #{tpu_custom_call.1} parent=11 // pred_check
          %p267 = pneg %p89
        $region18: #{tpu_custom_call.1} parent=11 // pred_check_branch
          %269 = sbr.rel (%p267) target = $region20
        $region19: #{tpu_custom_call.1} parent=11 // pred_region
          %s271 = ssub.s32 64, 64
          %272 = vsyncadd [#allocation6], %s271
          %s274 = sshll.u32 [#allocation5], 4
          %s275 = int_to_ptr.vmem [resolvable:$true] %s274
          %277 = dma.hbm_to_vmem [thread:$0]  %s2, 64, %s275, [#allocation6]
        $region20: #{tpu_custom_call.1} parent=11 // pred_fallthru
          _
        // Predicated region
        $region21: #{tpu_custom_call.1} parent=11 // pred_check
          %p278 = pneg %p110
        $region22: #{tpu_custom_call.1} parent=11 // pred_check_branch
          %280 = sbr.rel (%p278) target = $region24
        $region23: #{tpu_custom_call.1} parent=11 // pred_region
          %s282 = ssub.s32 16384, 16384
          %283 = vsyncadd [#allocation6], %s282
          %s284 = sshll.u32 [#allocation7], 4
          %s285 = int_to_ptr.vmem [resolvable:$true] %s284
          %290 = dma.hbm_to_vmem [thread:$0]  %s3, 16384, %s285, [#allocation6], 256, 256, 16
        $region24: #{tpu_custom_call.1} parent=11 // pred_fallthru
          _
        // Predicated region
        $region25: #{tpu_custom_call.1} parent=11 // pred_check
          %p291 = pneg %p131
        $region26: #{tpu_custom_call.1} parent=11 // pred_check_branch
          %293 = sbr.rel (%p291) target = $region28
        $region27: #{tpu_custom_call.1} parent=11 // pred_region
          %s295 = ssub.s32 64, 64
          %296 = vsyncadd [#allocation9], %s295
          %s298 = sshll.u32 [#allocation8], 4
          %s299 = int_to_ptr.vmem [resolvable:$true] %s298
          %301 = dma.hbm_to_vmem [thread:$0]  %s4, 64, %s299, [#allocation9]
        $region28: #{tpu_custom_call.1} parent=11 // pred_fallthru
          _
        // Predicated region
        $region29: #{tpu_custom_call.1} parent=11 // pred_check
          %p302 = pneg %p152
        $region30: #{tpu_custom_call.1} parent=11 // pred_check_branch
          %304 = sbr.rel (%p302) target = $region32
        $region31: #{tpu_custom_call.1} parent=11 // pred_region
          %s306 = ssub.s32 4096, 4096
          %307 = vsyncadd [#allocation9], %s306
          %s308 = sshll.u32 [#allocation10], 4
          %s309 = int_to_ptr.vmem [resolvable:$true] %s308
          %314 = dma.hbm_to_vmem [thread:$0]  %s5, 4096, %s309, [#allocation9], 64, 64, 4
        $region32: #{tpu_custom_call.1} parent=11 // pred_fallthru
          _
        // Predicated region
        $region33: #{tpu_custom_call.1} parent=11 // pred_check
          %p315 = pneg %p173
        $region34: #{tpu_custom_call.1} parent=11 // pred_check_branch
          %317 = sbr.rel (%p315) target = $region36
        $region35: #{tpu_custom_call.1} parent=11 // pred_region
          _
        $region36: #{tpu_custom_call.1} parent=11 // pred_fallthru
          _
        // Predicated region
        $region37: #{tpu_custom_call.1} parent=11 // pred_check
          %p318 = pneg %p194
        $region38: #{tpu_custom_call.1} parent=11 // pred_check_branch
          %320 = sbr.rel (%p318) target = $region40
        $region39: #{tpu_custom_call.1} parent=11 // pred_region
          _
        $region40: #{tpu_custom_call.1} parent=11 // pred_fallthru
          _
        // Predicated region
        $region41: #{tpu_custom_call.1} parent=11 // pred_check
          %p321 = pneg %p215
        $region42: #{tpu_custom_call.1} parent=11 // pred_check_branch
          %323 = sbr.rel (%p321) target = $region44
        $region43: #{tpu_custom_call.1} parent=11 // pred_region
          _
        $region44: #{tpu_custom_call.1} parent=11 // pred_fallthru
          _
      $region12: #{tpu_custom_call.1} parent=5 // pred_fallthru
        _
      %p324 = scmp.lt.s32.totalorder %s21, 2
      // Predicated region
      $region45: #{tpu_custom_call.1} parent=5 // pred_check
        %p325 = pneg %p324
      $region46: #{tpu_custom_call.1} parent=5 // pred_check_branch
        %327 = sbr.rel (%p325) target = $region48
      $region47: #{tpu_custom_call.1} parent=5 // pred_region
        // Predicated region
        $region49: #{tpu_custom_call.1} parent=47 // pred_check
          %p328 = pneg %p41
        $region50: #{tpu_custom_call.1} parent=47 // pred_check_branch
          %330 = sbr.rel (%p328) target = $region52
        $region51: #{tpu_custom_call.1} parent=47 // pred_region
          %s331 = smul.u32 2, %s21
          %p332 = scmp.lt.s32.totalorder %s331, 3
          %s333 = scalar_select %p332, %s331, 3
          %s334 = smul.addr %s333, 8
          %s335 = scalar_lea.vmem %s0, %s334
          %s336 = smul.u32 2, %s21
        $region52: #{tpu_custom_call.1} parent=47 // pred_fallthru
          _
      $region48: #{tpu_custom_call.1} parent=5 // pred_fallthru
        _
      %p337 = scmp.le.s32.totalorder 1, %s21
      %p338 = scmp.lt.s32.totalorder %s21, 3
      %p339 = pnand %p337, %p338
      %p340 = pneg %p339
      // Predicated region
      $region53: #{tpu_custom_call.1} parent=5 // pred_check
        _
      $region54: #{tpu_custom_call.1} parent=5 // pred_check_branch
        %342 = sbr.rel (%p339) target = $region56
      $region55: #{tpu_custom_call.1} parent=5 // pred_region
        %s343 = ssub.s32 %s21, 1
        // Predicated region
        $region57: #{tpu_custom_call.1} parent=55 // pred_check
          %p344 = pneg %p68
        $region58: #{tpu_custom_call.1} parent=55 // pred_check_branch
          %346 = sbr.rel (%p344) target = $region60
        $region59: #{tpu_custom_call.1} parent=55 // pred_region
          %347 = dma.done [#allocation3], 256
        $region60: #{tpu_custom_call.1} parent=55 // pred_fallthru
          _
        // Predicated region
        $region61: #{tpu_custom_call.1} parent=55 // pred_check
          %p348 = pneg %p89
        $region62: #{tpu_custom_call.1} parent=55 // pred_check_branch
          %350 = sbr.rel (%p348) target = $region64
        $region63: #{tpu_custom_call.1} parent=55 // pred_region
          %351 = dma.done [#allocation6], 64
        $region64: #{tpu_custom_call.1} parent=55 // pred_fallthru
          _
        // Predicated region
        $region65: #{tpu_custom_call.1} parent=55 // pred_check
          %p352 = pneg %p110
        $region66: #{tpu_custom_call.1} parent=55 // pred_check_branch
          %354 = sbr.rel (%p352) target = $region68
        $region67: #{tpu_custom_call.1} parent=55 // pred_region
          %355 = dma.done [#allocation6], 16384
        $region68: #{tpu_custom_call.1} parent=55 // pred_fallthru
          _
        // Predicated region
        $region69: #{tpu_custom_call.1} parent=55 // pred_check
          %p356 = pneg %p131
        $region70: #{tpu_custom_call.1} parent=55 // pred_check_branch
          %358 = sbr.rel (%p356) target = $region72
        $region71: #{tpu_custom_call.1} parent=55 // pred_region
          %359 = dma.done [#allocation9], 64
        $region72: #{tpu_custom_call.1} parent=55 // pred_fallthru
          _
        // Predicated region
        $region73: #{tpu_custom_call.1} parent=55 // pred_check
          %p360 = pneg %p152
        $region74: #{tpu_custom_call.1} parent=55 // pred_check_branch
          %362 = sbr.rel (%p360) target = $region76
        $region75: #{tpu_custom_call.1} parent=55 // pred_region
          %363 = dma.done [#allocation9], 4096
        $region76: #{tpu_custom_call.1} parent=55 // pred_fallthru
          _
        %s364 = smul.u32 2, %s26
        %p365 = scmp.lt.s32.totalorder %s364, 3
        %s366 = scalar_select %p365, %s364, 3
        %s367 = smul.addr %s366, 8
        %s368 = scalar_lea.vmem %s0, %s367
        %p369 = pneg %p47
        %p370 = pneg %p44
        %p371 = pneg %p68
        %p372 = pneg %p65
        %p373 = pneg %p89
        %p374 = pneg %p86
        %p375 = pneg %p110
        %p376 = pneg %p107
        %p377 = pneg %p131
        %p378 = pneg %p128
        %p379 = pneg %p152
        %p380 = pneg %p149
        %p381 = pneg %p173
        %p382 = pneg %p170
        %p383 = pneg %p194
        %p384 = pneg %p191
        %p385 = pneg %p215
        %p386 = pneg %p212
        %p387 = pneg %p241
        %p388 = pneg %p238
        %s389 = sand.u32 %s228, 1
        %s390 = scalar_lea.sflag [#allocation4], %s389
        %s391 = sand.u32 %s228, 1
        %s392 = smul.addr %s391, 8
        %s393 = scalar_lea.vmem [#allocation11], %s392
        %s394 = smul.u32 2, %s26
        %p395 = scmp.lt.s32.totalorder %s394, 3
        %s396 = scalar_select %p395, %s394, 3
        %s397 = smul.addr %s396, 8
        %s398 = scalar_lea.vmem %s0, %s397
        %s399 = smul.u32 2, %s26
        %s400 = smul.u32 2, %s26
        %v402 = vld [vmem:[%s398] sm:$0xff]
        %v403 = vld [vmem:[%s398 + $0x8] sm:$0xff]
        %v404 = vpack.c.bf16 %v403, %v402
        %v405 = vld [vmem:[#allocation2] sm:$0xff]
        %v406 = vld [vmem:[#allocation2 + $0x8] sm:$0xff]
        %v409 = vunpack.c.l.b16 %v405
        %v410 = vunpack.c.h.b16 %v405
        %v411 = vunpack.c.l.b16 %v406
        %v412 = vunpack.c.h.b16 %v406
        %v413 = vpack.c.b16 %v409, %v409
        %v414 = vpack.c.b16 %v410, %v410
        %v415 = vpack.c.b16 %v411, %v411
        %v416 = vpack.c.b16 %v412, %v412
        %vm417 = vcmask 64512
        %v419 = vsel %vm417, %v404, 0
        %vm421 = vcmask 1043456
        %v423 = vsel %vm421, %v413, 0
        %v426 = vsel %vm421, %v414, 0
        %v429 = vsel %vm421, %v415, 0
        %v432 = vsel %vm421, %v416, 0
        %434 = vmatprep.subr.bf16.mxu0 %v426
        %435 = vmatpush1.bf16.msra.mxu0 %v423
        %436 = vmatprep.subr.bf16.mxu0 0
        %437 = vmatpush1.bf16.msra.mxu0 0
        %438 = vmatprep.subr.bf16.mxu0 0
        %439 = vmatpush1.bf16.msra.mxu0 0
        %440 = vmatprep.subr.bf16.mxu0 0
        %441 = vmatpush1.bf16.msra.mxu0 0
        %442 = vmatprep.subr.bf16.mxu0 0
        %443 = vmatpush1.bf16.msra.mxu0 0
        %444 = vmatprep.subr.bf16.mxu0 0
        %445 = vmatpush1.bf16.msra.mxu0 0
        %446 = vmatprep.subr.bf16.mxu0 0
        %447 = vmatpush1.bf16.msra.mxu0 0
        %448 = vmatprep.subr.bf16.mxu0 0
        %449 = vmatpush1.bf16.msra.mxu0 0
        %450 = vmatprep.subr.bf16.mxu0 0
        %451 = vmatpush1.bf16.msra.mxu0 0
        %452 = vmatprep.subr.bf16.mxu0 0
        %453 = vmatpush1.bf16.msra.mxu0 0
        %454 = vmatprep.subr.bf16.mxu0 0
        %455 = vmatpush1.bf16.msra.mxu0 0
        %456 = vmatprep.subr.bf16.mxu0 0
        %457 = vmatpush1.bf16.msra.mxu0 0
        %458 = vmatprep.subr.bf16.mxu0 0
        %459 = vmatpush1.bf16.msra.mxu0 0
        %460 = vmatprep.subr.bf16.mxu0 0
        %461 = vmatpush1.bf16.msra.mxu0 0
        %462 = vmatprep.subr.bf16.mxu0 0
        %463 = vmatpush1.bf16.msra.mxu0 0
        %464 = vmatprep.subr.bf16.mxu0 0
        %465 = vmatpush1.bf16.msra.mxu0 0
        %466 = vmatprep.mubr.bf16.mxu0 0
        %467 = vmatmul.mubr.bf16.gmra.mrb[0].mxu0 %v419
        %v468 = vpop.f32.mrb[0].mxu0
        %v469 = vadd.f32 0.0, %v468
        %v470 = vpop.f32.mrb[0].mxu0
        %v471 = vadd.f32 0.0, %v470
        %v472 = vpop.f32.mrb[0].mxu0
        %v473 = vadd.f32 0.0, %v472
        %v474 = vpop.f32.mrb[0].mxu0
        %v475 = vadd.f32 0.0, %v474
        %476 = vdwg.mxu0
        %477 = vmatprep.subr.bf16.mxu0 %v432
        %478 = vmatpush1.bf16.msra.mxu0 %v429
        %479 = vmatprep.subr.bf16.mxu0 0
        %480 = vmatpush1.bf16.msra.mxu0 0
        %481 = vmatprep.subr.bf16.mxu0 0
        %482 = vmatpush1.bf16.msra.mxu0 0
        %483 = vmatprep.subr.bf16.mxu0 0
        %484 = vmatpush1.bf16.msra.mxu0 0
        %485 = vmatprep.subr.bf16.mxu0 0
        %486 = vmatpush1.bf16.msra.mxu0 0
        %487 = vmatprep.subr.bf16.mxu0 0
        %488 = vmatpush1.bf16.msra.mxu0 0
        %489 = vmatprep.subr.bf16.mxu0 0
        %490 = vmatpush1.bf16.msra.mxu0 0
        %491 = vmatprep.subr.bf16.mxu0 0
        %492 = vmatpush1.bf16.msra.mxu0 0
        %493 = vmatprep.subr.bf16.mxu0 0
        %494 = vmatpush1.bf16.msra.mxu0 0
        %495 = vmatprep.subr.bf16.mxu0 0
        %496 = vmatpush1.bf16.msra.mxu0 0
        %497 = vmatprep.subr.bf16.mxu0 0
        %498 = vmatpush1.bf16.msra.mxu0 0
        %499 = vmatprep.subr.bf16.mxu0 0
        %500 = vmatpush1.bf16.msra.mxu0 0
        %501 = vmatprep.subr.bf16.mxu0 0
        %502 = vmatpush1.bf16.msra.mxu0 0
        %503 = vmatprep.subr.bf16.mxu0 0
        %504 = vmatpush1.bf16.msra.mxu0 0
        %505 = vmatprep.subr.bf16.mxu0 0
        %506 = vmatpush1.bf16.msra.mxu0 0
        %507 = vmatprep.subr.bf16.mxu0 0
        %508 = vmatpush1.bf16.msra.mxu0 0
        %509 = vmatprep.mubr.bf16.mxu0 0
        %510 = vmatmul.mubr.bf16.gmra.mrb[0].mxu0 %v419
        %v511 = vpop.f32.mrb[0].mxu0
        %v512 = vadd.f32 0.0, %v511
        %v513 = vpop.f32.mrb[0].mxu0
        %v514 = vadd.f32 0.0, %v513
        %v515 = vpop.f32.mrb[0].mxu0
        %v516 = vadd.f32 0.0, %v515
        %v517 = vpop.f32.mrb[0].mxu0
        %v518 = vadd.f32 0.0, %v517
        %519 = vdwg.mxu0
        %v520 = vpack.c.bf16 %v473, %v469
        %v521 = vpack.c.bf16 %v475, %v471
        %v522 = vpack.c.bf16 %v516, %v512
        %v523 = vpack.c.bf16 %v518, %v514
        %v524 = vld [vmem:[#allocation5] sm:$0xf]
        %v527 = vunpack.c.l.s4 1966171168
        %v528 = vunpack.c.0.s8 %v527
        %v529 = vlaneseq
        %v530 = vshrl.u32 %v529, 7
        %v531 = vsub.s32 %v528, %v530
        %v532 = vrot.slane %v524, %v531
        %v533 = vcombine.high %v532, %v532
        %v535 = vunpack.c.l.s4 1966171168
        %v536 = vunpack.c.0.s8 %v535
        %v537 = vlaneseq
        %v538 = vshrl.u32 %v537, 7
        %v539 = vsub.s32 %v536, %v538
        %v540 = vrot.slane %v532, %v539
        %v542 = vunpack.c.l.s4 1966171168
        %v543 = vunpack.c.0.s8 %v542
        %v544 = vlaneseq
        %v545 = vshrl.u32 %v544, 7
        %v546 = vsub.s32 %v543, %v545
        %v547 = vrot.slane %v533, %v546
        %v548 = vcombine.high %v540, %v540
        %v549 = vcombine.high %v547, %v547
        %v551 = vpack.i.b16 %v540, %v540
        %v553 = vlaneseq
        %v554 = vshrl.u32 %v553, 7
        %v555 = vsub.s32 0, %v554
        %v556 = vrot.slane %v551, %v555
        %v558 = vpack.i.b16 %v547, %v547
        %v560 = vlaneseq
        %v561 = vshrl.u32 %v560, 7
        %v562 = vsub.s32 0, %v561
        %v563 = vrot.slane %v558, %v562
        %v565 = vpack.i.b16 %v548, %v548
        %v567 = vlaneseq
        %v568 = vshrl.u32 %v567, 7
        %v569 = vsub.s32 0, %v568
        %v570 = vrot.slane %v565, %v569
        %v572 = vpack.i.b16 %v549, %v549
        %v574 = vlaneseq
        %v575 = vshrl.u32 %v574, 7
        %v576 = vsub.s32 0, %v575
        %v577 = vrot.slane %v572, %v576
        %v578 = vadd.bf16 %v520, %v556
        %v579 = vadd.bf16 %v521, %v563
        %v580 = vadd.bf16 %v522, %v570
        %v581 = vadd.bf16 %v523, %v577
        %v582 = vmax.bf16 %v578, 0
        %v583 = vmax.bf16 %v579, 0
        %v584 = vmax.bf16 %v580, 0
        %v585 = vmax.bf16 %v581, 0
        %v586 = vld [vmem:[#allocation7] sm:$0xff]
        %v587 = vld [vmem:[#allocation7 + $0x8] sm:$0xff]
        %v588 = vld [vmem:[#allocation7 + $0x10] sm:$0xff]
        %v589 = vld [vmem:[#allocation7 + $0x18] sm:$0xff]
        %v590 = vld [vmem:[#allocation7 + $0x20] sm:$0xff]
        %v591 = vld [vmem:[#allocation7 + $0x28] sm:$0xff]
        %v592 = vld [vmem:[#allocation7 + $0x30] sm:$0xff]
        %v593 = vld [vmem:[#allocation7 + $0x38] sm:$0xff]
        %v594 = vld [vmem:[#allocation7 + $0x40] sm:$0xff]
        %v595 = vld [vmem:[#allocation7 + $0x48] sm:$0xff]
        %v596 = vld [vmem:[#allocation7 + $0x50] sm:$0xff]
        %v597 = vld [vmem:[#allocation7 + $0x58] sm:$0xff]
        %v598 = vld [vmem:[#allocation7 + $0x60] sm:$0xff]
        %v599 = vld [vmem:[#allocation7 + $0x68] sm:$0xff]
        %v600 = vld [vmem:[#allocation7 + $0x70] sm:$0xff]
        %v601 = vld [vmem:[#allocation7 + $0x78] sm:$0xff]
        %v602 = vld [vmem:[#allocation7 + $0x80] sm:$0xff]
        %v603 = vld [vmem:[#allocation7 + $0x88] sm:$0xff]
        %v604 = vld [vmem:[#allocation7 + $0x90] sm:$0xff]
        %v605 = vld [vmem:[#allocation7 + $0x98] sm:$0xff]
        %v606 = vld [vmem:[#allocation7 + $0xa0] sm:$0xff]
        %v607 = vld [vmem:[#allocation7 + $0xa8] sm:$0xff]
        %v608 = vld [vmem:[#allocation7 + $0xb0] sm:$0xff]
        %v609 = vld [vmem:[#allocation7 + $0xb8] sm:$0xff]
        %v610 = vld [vmem:[#allocation7 + $0xc0] sm:$0xff]
        %v611 = vld [vmem:[#allocation7 + $0xc8] sm:$0xff]
        %v612 = vld [vmem:[#allocation7 + $0xd0] sm:$0xff]
        %v613 = vld [vmem:[#allocation7 + $0xd8] sm:$0xff]
        %v614 = vld [vmem:[#allocation7 + $0xe0] sm:$0xff]
        %v615 = vld [vmem:[#allocation7 + $0xe8] sm:$0xff]
        %v616 = vld [vmem:[#allocation7 + $0xf0] sm:$0xff]
        %v617 = vld [vmem:[#allocation7 + $0xf8] sm:$0xff]
        %v618 = vld [vmem:[#allocation7 + $0x100] sm:$0xff]
        %v619 = vld [vmem:[#allocation7 + $0x108] sm:$0xff]
        %v620 = vld [vmem:[#allocation7 + $0x110] sm:$0xff]
        %v621 = vld [vmem:[#allocation7 + $0x118] sm:$0xff]
        %v622 = vld [vmem:[#allocation7 + $0x120] sm:$0xff]
        %v623 = vld [vmem:[#allocation7 + $0x128] sm:$0xff]
        %v624 = vld [vmem:[#allocation7 + $0x130] sm:$0xff]
        %v625 = vld [vmem:[#allocation7 + $0x138] sm:$0xff]
        %v626 = vld [vmem:[#allocation7 + $0x140] sm:$0xff]
        %v627 = vld [vmem:[#allocation7 + $0x148] sm:$0xff]
        %v628 = vld [vmem:[#allocation7 + $0x150] sm:$0xff]
        %v629 = vld [vmem:[#allocation7 + $0x158] sm:$0xff]
        %v630 = vld [vmem:[#allocation7 + $0x160] sm:$0xff]
        %v631 = vld [vmem:[#allocation7 + $0x168] sm:$0xff]
        %v632 = vld [vmem:[#allocation7 + $0x170] sm:$0xff]
        %v633 = vld [vmem:[#allocation7 + $0x178] sm:$0xff]
        %v634 = vld [vmem:[#allocation7 + $0x180] sm:$0xff]
        %v635 = vld [vmem:[#allocation7 + $0x188] sm:$0xff]
        %v636 = vld [vmem:[#allocation7 + $0x190] sm:$0xff]
        %v637 = vld [vmem:[#allocation7 + $0x198] sm:$0xff]
        %v638 = vld [vmem:[#allocation7 + $0x1a0] sm:$0xff]
        %v639 = vld [vmem:[#allocation7 + $0x1a8] sm:$0xff]
        %v640 = vld [vmem:[#allocation7 + $0x1b0] sm:$0xff]
        %v641 = vld [vmem:[#allocation7 + $0x1b8] sm:$0xff]
        %v642 = vld [vmem:[#allocation7 + $0x1c0] sm:$0xff]
        %v643 = vld [vmem:[#allocation7 + $0x1c8] sm:$0xff]
        %v644 = vld [vmem:[#allocation7 + $0x1d0] sm:$0xff]
        %v645 = vld [vmem:[#allocation7 + $0x1d8] sm:$0xff]
        %v646 = vld [vmem:[#allocation7 + $0x1e0] sm:$0xff]
        %v647 = vld [vmem:[#allocation7 + $0x1e8] sm:$0xff]
        %v648 = vld [vmem:[#allocation7 + $0x1f0] sm:$0xff]
        %v649 = vld [vmem:[#allocation7 + $0x1f8] sm:$0xff]
        %v650 = vld [vmem:[#allocation7 + $0x200] sm:$0xff]
        %v651 = vld [vmem:[#allocation7 + $0x208] sm:$0xff]
        %v652 = vld [vmem:[#allocation7 + $0x210] sm:$0xff]
        %v653 = vld [vmem:[#allocation7 + $0x218] sm:$0xff]
        %v654 = vld [vmem:[#allocation7 + $0x220] sm:$0xff]
        %v655 = vld [vmem:[#allocation7 + $0x228] sm:$0xff]
        %v656 = vld [vmem:[#allocation7 + $0x230] sm:$0xff]
        %v657 = vld [vmem:[#allocation7 + $0x238] sm:$0xff]
        %v658 = vld [vmem:[#allocation7 + $0x240] sm:$0xff]
        %v659 = vld [vmem:[#allocation7 + $0x248] sm:$0xff]
        %v660 = vld [vmem:[#allocation7 + $0x250] sm:$0xff]
        %v661 = vld [vmem:[#allocation7 + $0x258] sm:$0xff]
        %v662 = vld [vmem:[#allocation7 + $0x260] sm:$0xff]
        %v663 = vld [vmem:[#allocation7 + $0x268] sm:$0xff]
        %v664 = vld [vmem:[#allocation7 + $0x270] sm:$0xff]
        %v665 = vld [vmem:[#allocation7 + $0x278] sm:$0xff]
        %v666 = vld [vmem:[#allocation7 + $0x280] sm:$0xff]
        %v667 = vld [vmem:[#allocation7 + $0x288] sm:$0xff]
        %v668 = vld [vmem:[#allocation7 + $0x290] sm:$0xff]
        %v669 = vld [vmem:[#allocation7 + $0x298] sm:$0xff]
        %v670 = vld [vmem:[#allocation7 + $0x2a0] sm:$0xff]
        %v671 = vld [vmem:[#allocation7 + $0x2a8] sm:$0xff]
        %v672 = vld [vmem:[#allocation7 + $0x2b0] sm:$0xff]
        %v673 = vld [vmem:[#allocation7 + $0x2b8] sm:$0xff]
        %v674 = vld [vmem:[#allocation7 + $0x2c0] sm:$0xff]
        %v675 = vld [vmem:[#allocation7 + $0x2c8] sm:$0xff]
        %v676 = vld [vmem:[#allocation7 + $0x2d0] sm:$0xff]
        %v677 = vld [vmem:[#allocation7 + $0x2d8] sm:$0xff]
        %v678 = vld [vmem:[#allocation7 + $0x2e0] sm:$0xff]
        %v679 = vld [vmem:[#allocation7 + $0x2e8] sm:$0xff]
        %v680 = vld [vmem:[#allocation7 + $0x2f0] sm:$0xff]
        %v681 = vld [vmem:[#allocation7 + $0x2f8] sm:$0xff]
        %v682 = vld [vmem:[#allocation7 + $0x300] sm:$0xff]
        %v683 = vld [vmem:[#allocation7 + $0x308] sm:$0xff]
        %v684 = vld [vmem:[#allocation7 + $0x310] sm:$0xff]
        %v685 = vld [vmem:[#allocation7 + $0x318] sm:$0xff]
        %v686 = vld [vmem:[#allocation7 + $0x320] sm:$0xff]
        %v687 = vld [vmem:[#allocation7 + $0x328] sm:$0xff]
        %v688 = vld [vmem:[#allocation7 + $0x330] sm:$0xff]
        %v689 = vld [vmem:[#allocation7 + $0x338] sm:$0xff]
        %v690 = vld [vmem:[#allocation7 + $0x340] sm:$0xff]
        %v691 = vld [vmem:[#allocation7 + $0x348] sm:$0xff]
        %v692 = vld [vmem:[#allocation7 + $0x350] sm:$0xff]
        %v693 = vld [vmem:[#allocation7 + $0x358] sm:$0xff]
        %v694 = vld [vmem:[#allocation7 + $0x360] sm:$0xff]
        %v695 = vld [vmem:[#allocation7 + $0x368] sm:$0xff]
        %v696 = vld [vmem:[#allocation7 + $0x370] sm:$0xff]
        %v697 = vld [vmem:[#allocation7 + $0x378] sm:$0xff]
        %v698 = vld [vmem:[#allocation7 + $0x380] sm:$0xff]
        %v699 = vld [vmem:[#allocation7 + $0x388] sm:$0xff]
        %v700 = vld [vmem:[#allocation7 + $0x390] sm:$0xff]
        %v701 = vld [vmem:[#allocation7 + $0x398] sm:$0xff]
        %v702 = vld [vmem:[#allocation7 + $0x3a0] sm:$0xff]
        %v703 = vld [vmem:[#allocation7 + $0x3a8] sm:$0xff]
        %v704 = vld [vmem:[#allocation7 + $0x3b0] sm:$0xff]
        %v705 = vld [vmem:[#allocation7 + $0x3b8] sm:$0xff]
        %v706 = vld [vmem:[#allocation7 + $0x3c0] sm:$0xff]
        %v707 = vld [vmem:[#allocation7 + $0x3c8] sm:$0xff]
        %v708 = vld [vmem:[#allocation7 + $0x3d0] sm:$0xff]
        %v709 = vld [vmem:[#allocation7 + $0x3d8] sm:$0xff]
        %v710 = vld [vmem:[#allocation7 + $0x3e0] sm:$0xff]
        %v711 = vld [vmem:[#allocation7 + $0x3e8] sm:$0xff]
        %v712 = vld [vmem:[#allocation7 + $0x3f0] sm:$0xff]
        %v713 = vld [vmem:[#allocation7 + $0x3f8] sm:$0xff]
        %v842 = vunpack.c.l.b16 %v586
        %v843 = vunpack.c.h.b16 %v586
        %v844 = vunpack.c.l.b16 %v587
        %v845 = vunpack.c.h.b16 %v587
        %v846 = vunpack.c.l.b16 %v588
        %v847 = vunpack.c.h.b16 %v588
        %v848 = vunpack.c.l.b16 %v589
        %v849 = vunpack.c.h.b16 %v589
        %v850 = vunpack.c.l.b16 %v590
        %v851 = vunpack.c.h.b16 %v590
        %v852 = vunpack.c.l.b16 %v591
        %v853 = vunpack.c.h.b16 %v591
        %v854 = vunpack.c.l.b16 %v592
        %v855 = vunpack.c.h.b16 %v592
        %v856 = vunpack.c.l.b16 %v593
        %v857 = vunpack.c.h.b16 %v593
        %v858 = vunpack.c.l.b16 %v594
        %v859 = vunpack.c.h.b16 %v594
        %v860 = vunpack.c.l.b16 %v595
        %v861 = vunpack.c.h.b16 %v595
        %v862 = vunpack.c.l.b16 %v596
        %v863 = vunpack.c.h.b16 %v596
        %v864 = vunpack.c.l.b16 %v597
        %v865 = vunpack.c.h.b16 %v597
        %v866 = vunpack.c.l.b16 %v598
        %v867 = vunpack.c.h.b16 %v598
        %v868 = vunpack.c.l.b16 %v599
        %v869 = vunpack.c.h.b16 %v599
        %v870 = vunpack.c.l.b16 %v600
        %v871 = vunpack.c.h.b16 %v600
        %v872 = vunpack.c.l.b16 %v601
        %v873 = vunpack.c.h.b16 %v601
        %v874 = vunpack.c.l.b16 %v602
        %v875 = vunpack.c.h.b16 %v602
        %v876 = vunpack.c.l.b16 %v603
        %v877 = vunpack.c.h.b16 %v603
        %v878 = vunpack.c.l.b16 %v604
        %v879 = vunpack.c.h.b16 %v604
        %v880 = vunpack.c.l.b16 %v605
        %v881 = vunpack.c.h.b16 %v605
        %v882 = vunpack.c.l.b16 %v606
        %v883 = vunpack.c.h.b16 %v606
        %v884 = vunpack.c.l.b16 %v607
        %v885 = vunpack.c.h.b16 %v607
        %v886 = vunpack.c.l.b16 %v608
        %v887 = vunpack.c.h.b16 %v608
        %v888 = vunpack.c.l.b16 %v609
        %v889 = vunpack.c.h.b16 %v609
        %v890 = vunpack.c.l.b16 %v610
        %v891 = vunpack.c.h.b16 %v610
        %v892 = vunpack.c.l.b16 %v611
        %v893 = vunpack.c.h.b16 %v611
        %v894 = vunpack.c.l.b16 %v612
        %v895 = vunpack.c.h.b16 %v612
        %v896 = vunpack.c.l.b16 %v613
        %v897 = vunpack.c.h.b16 %v613
        %v898 = vunpack.c.l.b16 %v614
        %v899 = vunpack.c.h.b16 %v614
        %v900 = vunpack.c.l.b16 %v615
        %v901 = vunpack.c.h.b16 %v615
        %v902 = vunpack.c.l.b16 %v616
        %v903 = vunpack.c.h.b16 %v616
        %v904 = vunpack.c.l.b16 %v617
        %v905 = vunpack.c.h.b16 %v617
        %v906 = vunpack.c.l.b16 %v618
        %v907 = vunpack.c.h.b16 %v618
        %v908 = vunpack.c.l.b16 %v619
        %v909 = vunpack.c.h.b16 %v619
        %v910 = vunpack.c.l.b16 %v620
        %v911 = vunpack.c.h.b16 %v620
        %v912 = vunpack.c.l.b16 %v621
        %v913 = vunpack.c.h.b16 %v621
        %v914 = vunpack.c.l.b16 %v622
        %v915 = vunpack.c.h.b16 %v622
        %v916 = vunpack.c.l.b16 %v623
        %v917 = vunpack.c.h.b16 %v623
        %v918 = vunpack.c.l.b16 %v624
        %v919 = vunpack.c.h.b16 %v624
        %v920 = vunpack.c.l.b16 %v625
        %v921 = vunpack.c.h.b16 %v625
        %v922 = vunpack.c.l.b16 %v626
        %v923 = vunpack.c.h.b16 %v626
        %v924 = vunpack.c.l.b16 %v627
        %v925 = vunpack.c.h.b16 %v627
        %v926 = vunpack.c.l.b16 %v628
        %v927 = vunpack.c.h.b16 %v628
        %v928 = vunpack.c.l.b16 %v629
        %v929 = vunpack.c.h.b16 %v629
        %v930 = vunpack.c.l.b16 %v630
        %v931 = vunpack.c.h.b16 %v630
        %v932 = vunpack.c.l.b16 %v631
        %v933 = vunpack.c.h.b16 %v631
        %v934 = vunpack.c.l.b16 %v632
        %v935 = vunpack.c.h.b16 %v632
        %v936 = vunpack.c.l.b16 %v633
        %v937 = vunpack.c.h.b16 %v633
        %v938 = vunpack.c.l.b16 %v634
        %v939 = vunpack.c.h.b16 %v634
        %v940 = vunpack.c.l.b16 %v635
        %v941 = vunpack.c.h.b16 %v635
        %v942 = vunpack.c.l.b16 %v636
        %v943 = vunpack.c.h.b16 %v636
        %v944 = vunpack.c.l.b16 %v637
        %v945 = vunpack.c.h.b16 %v637
        %v946 = vunpack.c.l.b16 %v638
        %v947 = vunpack.c.h.b16 %v638
        %v948 = vunpack.c.l.b16 %v639
        %v949 = vunpack.c.h.b16 %v639
        %v950 = vunpack.c.l.b16 %v640
        %v951 = vunpack.c.h.b16 %v640
        %v952 = vunpack.c.l.b16 %v641
        %v953 = vunpack.c.h.b16 %v641
        %v954 = vunpack.c.l.b16 %v642
        %v955 = vunpack.c.h.b16 %v642
        %v956 = vunpack.c.l.b16 %v643
        %v957 = vunpack.c.h.b16 %v643
        %v958 = vunpack.c.l.b16 %v644
        %v959 = vunpack.c.h.b16 %v644
        %v960 = vunpack.c.l.b16 %v645
        %v961 = vunpack.c.h.b16 %v645
        %v962 = vunpack.c.l.b16 %v646
        %v963 = vunpack.c.h.b16 %v646
        %v964 = vunpack.c.l.b16 %v647
        %v965 = vunpack.c.h.b16 %v647
        %v966 = vunpack.c.l.b16 %v648
        %v967 = vunpack.c.h.b16 %v648
        %v968 = vunpack.c.l.b16 %v649
        %v969 = vunpack.c.h.b16 %v649
        %v970 = vunpack.c.l.b16 %v650
        %v971 = vunpack.c.h.b16 %v650
        %v972 = vunpack.c.l.b16 %v651
        %v973 = vunpack.c.h.b16 %v651
        %v974 = vunpack.c.l.b16 %v652
        %v975 = vunpack.c.h.b16 %v652
        %v976 = vunpack.c.l.b16 %v653
        %v977 = vunpack.c.h.b16 %v653
        %v978 = vunpack.c.l.b16 %v654
        %v979 = vunpack.c.h.b16 %v654
        %v980 = vunpack.c.l.b16 %v655
        %v981 = vunpack.c.h.b16 %v655
        %v982 = vunpack.c.l.b16 %v656
        %v983 = vunpack.c.h.b16 %v656
        %v984 = vunpack.c.l.b16 %v657
        %v985 = vunpack.c.h.b16 %v657
        %v986 = vunpack.c.l.b16 %v658
        %v987 = vunpack.c.h.b16 %v658
        %v988 = vunpack.c.l.b16 %v659
        %v989 = vunpack.c.h.b16 %v659
        %v990 = vunpack.c.l.b16 %v660
        %v991 = vunpack.c.h.b16 %v660
        %v992 = vunpack.c.l.b16 %v661
        %v993 = vunpack.c.h.b16 %v661
        %v994 = vunpack.c.l.b16 %v662
        %v995 = vunpack.c.h.b16 %v662
        %v996 = vunpack.c.l.b16 %v663
        %v997 = vunpack.c.h.b16 %v663
        %v998 = vunpack.c.l.b16 %v664
        %v999 = vunpack.c.h.b16 %v664
        %v1000 = vunpack.c.l.b16 %v665
        %v1001 = vunpack.c.h.b16 %v665
        %v1002 = vunpack.c.l.b16 %v666
        %v1003 = vunpack.c.h.b16 %v666
        %v1004 = vunpack.c.l.b16 %v667
        %v1005 = vunpack.c.h.b16 %v667
        %v1006 = vunpack.c.l.b16 %v668
        %v1007 = vunpack.c.h.b16 %v668
        %v1008 = vunpack.c.l.b16 %v669
        %v1009 = vunpack.c.h.b16 %v669
        %v1010 = vunpack.c.l.b16 %v670
        %v1011 = vunpack.c.h.b16 %v670
        %v1012 = vunpack.c.l.b16 %v671
        %v1013 = vunpack.c.h.b16 %v671
        %v1014 = vunpack.c.l.b16 %v672
        %v1015 = vunpack.c.h.b16 %v672
        %v1016 = vunpack.c.l.b16 %v673
        %v1017 = vunpack.c.h.b16 %v673
        %v1018 = vunpack.c.l.b16 %v674
        %v1019 = vunpack.c.h.b16 %v674
        %v1020 = vunpack.c.l.b16 %v675
        %v1021 = vunpack.c.h.b16 %v675
        %v1022 = vunpack.c.l.b16 %v676
        %v1023 = vunpack.c.h.b16 %v676
        %v1024 = vunpack.c.l.b16 %v677
        %v1025 = vunpack.c.h.b16 %v677
        %v1026 = vunpack.c.l.b16 %v678
        %v1027 = vunpack.c.h.b16 %v678
        %v1028 = vunpack.c.l.b16 %v679
        %v1029 = vunpack.c.h.b16 %v679
        %v1030 = vunpack.c.l.b16 %v680
        %v1031 = vunpack.c.h.b16 %v680
        %v1032 = vunpack.c.l.b16 %v681
        %v1033 = vunpack.c.h.b16 %v681
        %v1034 = vunpack.c.l.b16 %v682
        %v1035 = vunpack.c.h.b16 %v682
        %v1036 = vunpack.c.l.b16 %v683
        %v1037 = vunpack.c.h.b16 %v683
        %v1038 = vunpack.c.l.b16 %v684
        %v1039 = vunpack.c.h.b16 %v684
        %v1040 = vunpack.c.l.b16 %v685
        %v1041 = vunpack.c.h.b16 %v685
        %v1042 = vunpack.c.l.b16 %v686
        %v1043 = vunpack.c.h.b16 %v686
        %v1044 = vunpack.c.l.b16 %v687
        %v1045 = vunpack.c.h.b16 %v687
        %v1046 = vunpack.c.l.b16 %v688
        %v1047 = vunpack.c.h.b16 %v688
        %v1048 = vunpack.c.l.b16 %v689
        %v1049 = vunpack.c.h.b16 %v689
        %v1050 = vunpack.c.l.b16 %v690
        %v1051 = vunpack.c.h.b16 %v690
        %v1052 = vunpack.c.l.b16 %v691
        %v1053 = vunpack.c.h.b16 %v691
        %v1054 = vunpack.c.l.b16 %v692
        %v1055 = vunpack.c.h.b16 %v692
        %v1056 = vunpack.c.l.b16 %v693
        %v1057 = vunpack.c.h.b16 %v693
        %v1058 = vunpack.c.l.b16 %v694
        %v1059 = vunpack.c.h.b16 %v694
        %v1060 = vunpack.c.l.b16 %v695
        %v1061 = vunpack.c.h.b16 %v695
        %v1062 = vunpack.c.l.b16 %v696
        %v1063 = vunpack.c.h.b16 %v696
        %v1064 = vunpack.c.l.b16 %v697
        %v1065 = vunpack.c.h.b16 %v697
        %v1066 = vunpack.c.l.b16 %v698
        %v1067 = vunpack.c.h.b16 %v698
        %v1068 = vunpack.c.l.b16 %v699
        %v1069 = vunpack.c.h.b16 %v699
        %v1070 = vunpack.c.l.b16 %v700
        %v1071 = vunpack.c.h.b16 %v700
        %v1072 = vunpack.c.l.b16 %v701
        %v1073 = vunpack.c.h.b16 %v701
        %v1074 = vunpack.c.l.b16 %v702
        %v1075 = vunpack.c.h.b16 %v702
        %v1076 = vunpack.c.l.b16 %v703
        %v1077 = vunpack.c.h.b16 %v703
        %v1078 = vunpack.c.l.b16 %v704
        %v1079 = vunpack.c.h.b16 %v704
        %v1080 = vunpack.c.l.b16 %v705
        %v1081 = vunpack.c.h.b16 %v705
        %v1082 = vunpack.c.l.b16 %v706
        %v1083 = vunpack.c.h.b16 %v706
        %v1084 = vunpack.c.l.b16 %v707
        %v1085 = vunpack.c.h.b16 %v707
        %v1086 = vunpack.c.l.b16 %v708
        %v1087 = vunpack.c.h.b16 %v708
        %v1088 = vunpack.c.l.b16 %v709
        %v1089 = vunpack.c.h.b16 %v709
        %v1090 = vunpack.c.l.b16 %v710
        %v1091 = vunpack.c.h.b16 %v710
        %v1092 = vunpack.c.l.b16 %v711
        %v1093 = vunpack.c.h.b16 %v711
        %v1094 = vunpack.c.l.b16 %v712
        %v1095 = vunpack.c.h.b16 %v712
        %v1096 = vunpack.c.l.b16 %v713
        %v1097 = vunpack.c.h.b16 %v713
        %v1098 = vpack.c.b16 %v846, %v842
        %v1099 = vpack.c.b16 %v847, %v843
        %v1100 = vpack.c.b16 %v848, %v844
        %v1101 = vpack.c.b16 %v849, %v845
        %v1102 = vpack.c.b16 %v854, %v850
        %v1103 = vpack.c.b16 %v855, %v851
        %v1104 = vpack.c.b16 %v856, %v852
        %v1105 = vpack.c.b16 %v857, %v853
        %v1106 = vpack.c.b16 %v862, %v858
        %v1107 = vpack.c.b16 %v863, %v859
        %v1108 = vpack.c.b16 %v864, %v860
        %v1109 = vpack.c.b16 %v865, %v861
        %v1110 = vpack.c.b16 %v870, %v866
        %v1111 = vpack.c.b16 %v871, %v867
        %v1112 = vpack.c.b16 %v872, %v868
        %v1113 = vpack.c.b16 %v873, %v869
        %v1114 = vpack.c.b16 %v878, %v874
        %v1115 = vpack.c.b16 %v879, %v875
        %v1116 = vpack.c.b16 %v880, %v876
        %v1117 = vpack.c.b16 %v881, %v877
        %v1118 = vpack.c.b16 %v886, %v882
        %v1119 = vpack.c.b16 %v887, %v883
        %v1120 = vpack.c.b16 %v888, %v884
        %v1121 = vpack.c.b16 %v889, %v885
        %v1122 = vpack.c.b16 %v894, %v890
        %v1123 = vpack.c.b16 %v895, %v891
        %v1124 = vpack.c.b16 %v896, %v892
        %v1125 = vpack.c.b16 %v897, %v893
        %v1126 = vpack.c.b16 %v902, %v898
        %v1127 = vpack.c.b16 %v903, %v899
        %v1128 = vpack.c.b16 %v904, %v900
        %v1129 = vpack.c.b16 %v905, %v901
        %v1130 = vpack.c.b16 %v910, %v906
        %v1131 = vpack.c.b16 %v911, %v907
        %v1132 = vpack.c.b16 %v912, %v908
        %v1133 = vpack.c.b16 %v913, %v909
        %v1134 = vpack.c.b16 %v918, %v914
        %v1135 = vpack.c.b16 %v919, %v915
        %v1136 = vpack.c.b16 %v920, %v916
        %v1137 = vpack.c.b16 %v921, %v917
        %v1138 = vpack.c.b16 %v926, %v922
        %v1139 = vpack.c.b16 %v927, %v923
        %v1140 = vpack.c.b16 %v928, %v924
        %v1141 = vpack.c.b16 %v929, %v925
        %v1142 = vpack.c.b16 %v934, %v930
        %v1143 = vpack.c.b16 %v935, %v931
        %v1144 = vpack.c.b16 %v936, %v932
        %v1145 = vpack.c.b16 %v937, %v933
        %v1146 = vpack.c.b16 %v942, %v938
        %v1147 = vpack.c.b16 %v943, %v939
        %v1148 = vpack.c.b16 %v944, %v940
        %v1149 = vpack.c.b16 %v945, %v941
        %v1150 = vpack.c.b16 %v950, %v946
        %v1151 = vpack.c.b16 %v951, %v947
        %v1152 = vpack.c.b16 %v952, %v948
        %v1153 = vpack.c.b16 %v953, %v949
        %v1154 = vpack.c.b16 %v958, %v954
        %v1155 = vpack.c.b16 %v959, %v955
        %v1156 = vpack.c.b16 %v960, %v956
        %v1157 = vpack.c.b16 %v961, %v957
        %v1158 = vpack.c.b16 %v966, %v962
        %v1159 = vpack.c.b16 %v967, %v963
        %v1160 = vpack.c.b16 %v968, %v964
        %v1161 = vpack.c.b16 %v969, %v965
        %v1162 = vpack.c.b16 %v974, %v970
        %v1163 = vpack.c.b16 %v975, %v971
        %v1164 = vpack.c.b16 %v976, %v972
        %v1165 = vpack.c.b16 %v977, %v973
        %v1166 = vpack.c.b16 %v982, %v978
        %v1167 = vpack.c.b16 %v983, %v979
        %v1168 = vpack.c.b16 %v984, %v980
        %v1169 = vpack.c.b16 %v985, %v981
        %v1170 = vpack.c.b16 %v990, %v986
        %v1171 = vpack.c.b16 %v991, %v987
        %v1172 = vpack.c.b16 %v992, %v988
        %v1173 = vpack.c.b16 %v993, %v989
        %v1174 = vpack.c.b16 %v998, %v994
        %v1175 = vpack.c.b16 %v999, %v995
        %v1176 = vpack.c.b16 %v1000, %v996
        %v1177 = vpack.c.b16 %v1001, %v997
        %v1178 = vpack.c.b16 %v1006, %v1002
        %v1179 = vpack.c.b16 %v1007, %v1003
        %v1180 = vpack.c.b16 %v1008, %v1004
        %v1181 = vpack.c.b16 %v1009, %v1005
        %v1182 = vpack.c.b16 %v1014, %v1010
        %v1183 = vpack.c.b16 %v1015, %v1011
        %v1184 = vpack.c.b16 %v1016, %v1012
        %v1185 = vpack.c.b16 %v1017, %v1013
        %v1186 = vpack.c.b16 %v1022, %v1018
        %v1187 = vpack.c.b16 %v1023, %v1019
        %v1188 = vpack.c.b16 %v1024, %v1020
        %v1189 = vpack.c.b16 %v1025, %v1021
        %v1190 = vpack.c.b16 %v1030, %v1026
        %v1191 = vpack.c.b16 %v1031, %v1027
        %v1192 = vpack.c.b16 %v1032, %v1028
        %v1193 = vpack.c.b16 %v1033, %v1029
        %v1194 = vpack.c.b16 %v1038, %v1034
        %v1195 = vpack.c.b16 %v1039, %v1035
        %v1196 = vpack.c.b16 %v1040, %v1036
        %v1197 = vpack.c.b16 %v1041, %v1037
        %v1198 = vpack.c.b16 %v1046, %v1042
        %v1199 = vpack.c.b16 %v1047, %v1043
        %v1200 = vpack.c.b16 %v1048, %v1044
        %v1201 = vpack.c.b16 %v1049, %v1045
        %v1202 = vpack.c.b16 %v1054, %v1050
        %v1203 = vpack.c.b16 %v1055, %v1051
        %v1204 = vpack.c.b16 %v1056, %v1052
        %v1205 = vpack.c.b16 %v1057, %v1053
        %v1206 = vpack.c.b16 %v1062, %v1058
        %v1207 = vpack.c.b16 %v1063, %v1059
        %v1208 = vpack.c.b16 %v1064, %v1060
        %v1209 = vpack.c.b16 %v1065, %v1061
        %v1210 = vpack.c.b16 %v1070, %v1066
        %v1211 = vpack.c.b16 %v1071, %v1067
        %v1212 = vpack.c.b16 %v1072, %v1068
        %v1213 = vpack.c.b16 %v1073, %v1069
        %v1214 = vpack.c.b16 %v1078, %v1074
        %v1215 = vpack.c.b16 %v1079, %v1075
        %v1216 = vpack.c.b16 %v1080, %v1076
        %v1217 = vpack.c.b16 %v1081, %v1077
        %v1218 = vpack.c.b16 %v1086, %v1082
        %v1219 = vpack.c.b16 %v1087, %v1083
        %v1220 = vpack.c.b16 %v1088, %v1084
        %v1221 = vpack.c.b16 %v1089, %v1085
        %v1222 = vpack.c.b16 %v1094, %v1090
        %v1223 = vpack.c.b16 %v1095, %v1091
        %v1224 = vpack.c.b16 %v1096, %v1092
        %v1225 = vpack.c.b16 %v1097, %v1093
        %1354 = vmatprep.subr.bf16.mxu0 %v1099
        %1355 = vmatpush1.bf16.msra.mxu0 %v1098
        %1356 = vmatprep.subr.bf16.mxu0 %v1103
        %1357 = vmatpush1.bf16.msra.mxu0 %v1102
        %1358 = vmatprep.subr.bf16.mxu0 %v1107
        %1359 = vmatpush1.bf16.msra.mxu0 %v1106
        %1360 = vmatprep.subr.bf16.mxu0 %v1111
        %1361 = vmatpush1.bf16.msra.mxu0 %v1110
        %1362 = vmatprep.subr.bf16.mxu0 %v1115
        %1363 = vmatpush1.bf16.msra.mxu0 %v1114
        %1364 = vmatprep.subr.bf16.mxu0 %v1119
        %1365 = vmatpush1.bf16.msra.mxu0 %v1118
        %1366 = vmatprep.subr.bf16.mxu0 %v1123
        %1367 = vmatpush1.bf16.msra.mxu0 %v1122
        %1368 = vmatprep.subr.bf16.mxu0 %v1127
        %1369 = vmatpush1.bf16.msra.mxu0 %v1126
        %1370 = vmatprep.subr.bf16.mxu0 %v1131
        %1371 = vmatpush1.bf16.msra.mxu0 %v1130
        %1372 = vmatprep.subr.bf16.mxu0 %v1135
        %1373 = vmatpush1.bf16.msra.mxu0 %v1134
        %1374 = vmatprep.subr.bf16.mxu0 %v1139
        %1375 = vmatpush1.bf16.msra.mxu0 %v1138
        %1376 = vmatprep.subr.bf16.mxu0 %v1143
        %1377 = vmatpush1.bf16.msra.mxu0 %v1142
        %1378 = vmatprep.subr.bf16.mxu0 %v1147
        %1379 = vmatpush1.bf16.msra.mxu0 %v1146
        %1380 = vmatprep.subr.bf16.mxu0 %v1151
        %1381 = vmatpush1.bf16.msra.mxu0 %v1150
        %1382 = vmatprep.subr.bf16.mxu0 %v1155
        %1383 = vmatpush1.bf16.msra.mxu0 %v1154
        %1384 = vmatprep.subr.bf16.mxu0 %v1159
        %1385 = vmatpush1.bf16.msra.mxu0 %v1158
        %1386 = vmatprep.mubr.bf16.mxu0 %v583
        %1387 = vmatmul.mubr.bf16.gmra.mrb[0].mxu0 %v582
        %v1388 = vpop.f32.mrb[0].mxu0
        %v1389 = vadd.f32 0.0, %v1388
        %v1390 = vpop.f32.mrb[0].mxu0
        %v1391 = vadd.f32 0.0, %v1390
        %v1392 = vpop.f32.mrb[0].mxu0
        %v1393 = vadd.f32 0.0, %v1392
        %v1394 = vpop.f32.mrb[0].mxu0
        %v1395 = vadd.f32 0.0, %v1394
        %1396 = vdwg.mxu0
        %1397 = vmatprep.subr.bf16.mxu0 %v1163
        %1398 = vmatpush1.bf16.msra.mxu0 %v1162
        %1399 = vmatprep.subr.bf16.mxu0 %v1167
        %1400 = vmatpush1.bf16.msra.mxu0 %v1166
        %1401 = vmatprep.subr.bf16.mxu0 %v1171
        %1402 = vmatpush1.bf16.msra.mxu0 %v1170
        %1403 = vmatprep.subr.bf16.mxu0 %v1175
        %1404 = vmatpush1.bf16.msra.mxu0 %v1174
        %1405 = vmatprep.subr.bf16.mxu0 %v1179
        %1406 = vmatpush1.bf16.msra.mxu0 %v1178
        %1407 = vmatprep.subr.bf16.mxu0 %v1183
        %1408 = vmatpush1.bf16.msra.mxu0 %v1182
        %1409 = vmatprep.subr.bf16.mxu0 %v1187
        %1410 = vmatpush1.bf16.msra.mxu0 %v1186
        %1411 = vmatprep.subr.bf16.mxu0 %v1191
        %1412 = vmatpush1.bf16.msra.mxu0 %v1190
        %1413 = vmatprep.subr.bf16.mxu0 %v1195
        %1414 = vmatpush1.bf16.msra.mxu0 %v1194
        %1415 = vmatprep.subr.bf16.mxu0 %v1199
        %1416 = vmatpush1.bf16.msra.mxu0 %v1198
        %1417 = vmatprep.subr.bf16.mxu0 %v1203
        %1418 = vmatpush1.bf16.msra.mxu0 %v1202
        %1419 = vmatprep.subr.bf16.mxu0 %v1207
        %1420 = vmatpush1.bf16.msra.mxu0 %v1206
        %1421 = vmatprep.subr.bf16.mxu0 %v1211
        %1422 = vmatpush1.bf16.msra.mxu0 %v1210
        %1423 = vmatprep.subr.bf16.mxu0 %v1215
        %1424 = vmatpush1.bf16.msra.mxu0 %v1214
        %1425 = vmatprep.subr.bf16.mxu0 %v1219
        %1426 = vmatpush1.bf16.msra.mxu0 %v1218
        %1427 = vmatprep.subr.bf16.mxu0 %v1223
        %1428 = vmatpush1.bf16.msra.mxu0 %v1222
        %1429 = vmatprep.mubr.bf16.mxu0 %v585
        %1430 = vmatmul.mubr.bf16.gmra.mrb[0].mxu0 %v584
        %v1431 = vpop.f32.mrb[0].mxu0
        %v1432 = vadd.f32 %v1389, %v1431
        %v1433 = vpop.f32.mrb[0].mxu0
        %v1434 = vadd.f32 %v1391, %v1433
        %v1435 = vpop.f32.mrb[0].mxu0
        %v1436 = vadd.f32 %v1393, %v1435
        %v1437 = vpop.f32.mrb[0].mxu0
        %v1438 = vadd.f32 %v1395, %v1437
        %1439 = vdwg.mxu0
        %1440 = vmatprep.subr.bf16.mxu0 %v1101
        %1441 = vmatpush1.bf16.msra.mxu0 %v1100
        %1442 = vmatprep.subr.bf16.mxu0 %v1105
        %1443 = vmatpush1.bf16.msra.mxu0 %v1104
        %1444 = vmatprep.subr.bf16.mxu0 %v1109
        %1445 = vmatpush1.bf16.msra.mxu0 %v1108
        %1446 = vmatprep.subr.bf16.mxu0 %v1113
        %1447 = vmatpush1.bf16.msra.mxu0 %v1112
        %1448 = vmatprep.subr.bf16.mxu0 %v1117
        %1449 = vmatpush1.bf16.msra.mxu0 %v1116
        %1450 = vmatprep.subr.bf16.mxu0 %v1121
        %1451 = vmatpush1.bf16.msra.mxu0 %v1120
        %1452 = vmatprep.subr.bf16.mxu0 %v1125
        %1453 = vmatpush1.bf16.msra.mxu0 %v1124
        %1454 = vmatprep.subr.bf16.mxu0 %v1129
        %1455 = vmatpush1.bf16.msra.mxu0 %v1128
        %1456 = vmatprep.subr.bf16.mxu0 %v1133
        %1457 = vmatpush1.bf16.msra.mxu0 %v1132
        %1458 = vmatprep.subr.bf16.mxu0 %v1137
        %1459 = vmatpush1.bf16.msra.mxu0 %v1136
        %1460 = vmatprep.subr.bf16.mxu0 %v1141
        %1461 = vmatpush1.bf16.msra.mxu0 %v1140
        %1462 = vmatprep.subr.bf16.mxu0 %v1145
        %1463 = vmatpush1.bf16.msra.mxu0 %v1144
        %1464 = vmatprep.subr.bf16.mxu0 %v1149
        %1465 = vmatpush1.bf16.msra.mxu0 %v1148
        %1466 = vmatprep.subr.bf16.mxu0 %v1153
        %1467 = vmatpush1.bf16.msra.mxu0 %v1152
        %1468 = vmatprep.subr.bf16.mxu0 %v1157
        %1469 = vmatpush1.bf16.msra.mxu0 %v1156
        %1470 = vmatprep.subr.bf16.mxu0 %v1161
        %1471 = vmatpush1.bf16.msra.mxu0 %v1160
        %1472 = vmatprep.mubr.bf16.mxu0 %v583
        %1473 = vmatmul.mubr.bf16.gmra.mrb[0].mxu0 %v582
        %v1474 = vpop.f32.mrb[0].mxu0
        %v1475 = vadd.f32 0.0, %v1474
        %v1476 = vpop.f32.mrb[0].mxu0
        %v1477 = vadd.f32 0.0, %v1476
        %v1478 = vpop.f32.mrb[0].mxu0
        %v1479 = vadd.f32 0.0, %v1478
        %v1480 = vpop.f32.mrb[0].mxu0
        %v1481 = vadd.f32 0.0, %v1480
        %1482 = vdwg.mxu0
        %1483 = vmatprep.subr.bf16.mxu0 %v1165
        %1484 = vmatpush1.bf16.msra.mxu0 %v1164
        %1485 = vmatprep.subr.bf16.mxu0 %v1169
        %1486 = vmatpush1.bf16.msra.mxu0 %v1168
        %1487 = vmatprep.subr.bf16.mxu0 %v1173
        %1488 = vmatpush1.bf16.msra.mxu0 %v1172
        %1489 = vmatprep.subr.bf16.mxu0 %v1177
        %1490 = vmatpush1.bf16.msra.mxu0 %v1176
        %1491 = vmatprep.subr.bf16.mxu0 %v1181
        %1492 = vmatpush1.bf16.msra.mxu0 %v1180
        %1493 = vmatprep.subr.bf16.mxu0 %v1185
        %1494 = vmatpush1.bf16.msra.mxu0 %v1184
        %1495 = vmatprep.subr.bf16.mxu0 %v1189
        %1496 = vmatpush1.bf16.msra.mxu0 %v1188
        %1497 = vmatprep.subr.bf16.mxu0 %v1193
        %1498 = vmatpush1.bf16.msra.mxu0 %v1192
        %1499 = vmatprep.subr.bf16.mxu0 %v1197
        %1500 = vmatpush1.bf16.msra.mxu0 %v1196
        %1501 = vmatprep.subr.bf16.mxu0 %v1201
        %1502 = vmatpush1.bf16.msra.mxu0 %v1200
        %1503 = vmatprep.subr.bf16.mxu0 %v1205
        %1504 = vmatpush1.bf16.msra.mxu0 %v1204
        %1505 = vmatprep.subr.bf16.mxu0 %v1209
        %1506 = vmatpush1.bf16.msra.mxu0 %v1208
        %1507 = vmatprep.subr.bf16.mxu0 %v1213
        %1508 = vmatpush1.bf16.msra.mxu0 %v1212
        %1509 = vmatprep.subr.bf16.mxu0 %v1217
        %1510 = vmatpush1.bf16.msra.mxu0 %v1216
        %1511 = vmatprep.subr.bf16.mxu0 %v1221
        %1512 = vmatpush1.bf16.msra.mxu0 %v1220
        %1513 = vmatprep.subr.bf16.mxu0 %v1225
        %1514 = vmatpush1.bf16.msra.mxu0 %v1224
        %1515 = vmatprep.mubr.bf16.mxu0 %v585
        %1516 = vmatmul.mubr.bf16.gmra.mrb[0].mxu0 %v584
        %v1517 = vpop.f32.mrb[0].mxu0
        %v1518 = vadd.f32 %v1475, %v1517
        %v1519 = vpop.f32.mrb[0].mxu0
        %v1520 = vadd.f32 %v1477, %v1519
        %v1521 = vpop.f32.mrb[0].mxu0
        %v1522 = vadd.f32 %v1479, %v1521
        %v1523 = vpop.f32.mrb[0].mxu0
        %v1524 = vadd.f32 %v1481, %v1523
        %1525 = vdwg.mxu0
        %v1526 = vpack.c.bf16 %v1436, %v1432
        %v1527 = vpack.c.bf16 %v1438, %v1434
        %v1528 = vpack.c.bf16 %v1522, %v1518
        %v1529 = vpack.c.bf16 %v1524, %v1520
        %v1530 = vld [vmem:[#allocation8] sm:$0xf]
        %v1533 = vunpack.c.l.s4 1966171168
        %v1534 = vunpack.c.0.s8 %v1533
        %v1535 = vlaneseq
        %v1536 = vshrl.u32 %v1535, 7
        %v1537 = vsub.s32 %v1534, %v1536
        %v1538 = vrot.slane %v1530, %v1537
        %v1539 = vcombine.high %v1538, %v1538
        %v1541 = vunpack.c.l.s4 1966171168
        %v1542 = vunpack.c.0.s8 %v1541
        %v1543 = vlaneseq
        %v1544 = vshrl.u32 %v1543, 7
        %v1545 = vsub.s32 %v1542, %v1544
        %v1546 = vrot.slane %v1538, %v1545
        %v1548 = vunpack.c.l.s4 1966171168
        %v1549 = vunpack.c.0.s8 %v1548
        %v1550 = vlaneseq
        %v1551 = vshrl.u32 %v1550, 7
        %v1552 = vsub.s32 %v1549, %v1551
        %v1553 = vrot.slane %v1539, %v1552
        %v1554 = vcombine.high %v1546, %v1546
        %v1555 = vcombine.high %v1553, %v1553
        %v1557 = vpack.i.b16 %v1546, %v1546
        %v1559 = vlaneseq
        %v1560 = vshrl.u32 %v1559, 7
        %v1561 = vsub.s32 0, %v1560
        %v1562 = vrot.slane %v1557, %v1561
        %v1564 = vpack.i.b16 %v1553, %v1553
        %v1566 = vlaneseq
        %v1567 = vshrl.u32 %v1566, 7
        %v1568 = vsub.s32 0, %v1567
        %v1569 = vrot.slane %v1564, %v1568
        %v1571 = vpack.i.b16 %v1554, %v1554
        %v1573 = vlaneseq
        %v1574 = vshrl.u32 %v1573, 7
        %v1575 = vsub.s32 0, %v1574
        %v1576 = vrot.slane %v1571, %v1575
        %v1578 = vpack.i.b16 %v1555, %v1555
        %v1580 = vlaneseq
        %v1581 = vshrl.u32 %v1580, 7
        %v1582 = vsub.s32 0, %v1581
        %v1583 = vrot.slane %v1578, %v1582
        %v1584 = vadd.bf16 %v1526, %v1562
        %v1585 = vadd.bf16 %v1527, %v1569
        %v1586 = vadd.bf16 %v1528, %v1576
        %v1587 = vadd.bf16 %v1529, %v1583
        %v1588 = vmax.bf16 %v1584, 0
        %v1589 = vmax.bf16 %v1585, 0
        %v1590 = vmax.bf16 %v1586, 0
        %v1591 = vmax.bf16 %v1587, 0
        %v1592 = vld [vmem:[#allocation10] sm:$0xf]
        %v1593 = vld [vmem:[#allocation10 + $0x4] sm:$0xf]
        %v1594 = vld [vmem:[#allocation10 + $0x8] sm:$0xf]
        %v1595 = vld [vmem:[#allocation10 + $0xc] sm:$0xf]
        %v1596 = vld [vmem:[#allocation10 + $0x10] sm:$0xf]
        %v1597 = vld [vmem:[#allocation10 + $0x14] sm:$0xf]
        %v1598 = vld [vmem:[#allocation10 + $0x18] sm:$0xf]
        %v1599 = vld [vmem:[#allocation10 + $0x1c] sm:$0xf]
        %v1600 = vld [vmem:[#allocation10 + $0x20] sm:$0xf]
        %v1601 = vld [vmem:[#allocation10 + $0x24] sm:$0xf]
        %v1602 = vld [vmem:[#allocation10 + $0x28] sm:$0xf]
        %v1603 = vld [vmem:[#allocation10 + $0x2c] sm:$0xf]
        %v1604 = vld [vmem:[#allocation10 + $0x30] sm:$0xf]
        %v1605 = vld [vmem:[#allocation10 + $0x34] sm:$0xf]
        %v1606 = vld [vmem:[#allocation10 + $0x38] sm:$0xf]
        %v1607 = vld [vmem:[#allocation10 + $0x3c] sm:$0xf]
        %v1608 = vld [vmem:[#allocation10 + $0x40] sm:$0xf]
        %v1609 = vld [vmem:[#allocation10 + $0x44] sm:$0xf]
        %v1610 = vld [vmem:[#allocation10 + $0x48] sm:$0xf]
        %v1611 = vld [vmem:[#allocation10 + $0x4c] sm:$0xf]
        %v1612 = vld [vmem:[#allocation10 + $0x50] sm:$0xf]
        %v1613 = vld [vmem:[#allocation10 + $0x54] sm:$0xf]
        %v1614 = vld [vmem:[#allocation10 + $0x58] sm:$0xf]
        %v1615 = vld [vmem:[#allocation10 + $0x5c] sm:$0xf]
        %v1616 = vld [vmem:[#allocation10 + $0x60] sm:$0xf]
        %v1617 = vld [vmem:[#allocation10 + $0x64] sm:$0xf]
        %v1618 = vld [vmem:[#allocation10 + $0x68] sm:$0xf]
        %v1619 = vld [vmem:[#allocation10 + $0x6c] sm:$0xf]
        %v1620 = vld [vmem:[#allocation10 + $0x70] sm:$0xf]
        %v1621 = vld [vmem:[#allocation10 + $0x74] sm:$0xf]
        %v1622 = vld [vmem:[#allocation10 + $0x78] sm:$0xf]
        %v1623 = vld [vmem:[#allocation10 + $0x7c] sm:$0xf]
        %v1624 = vld [vmem:[#allocation10 + $0x80] sm:$0xf]
        %v1625 = vld [vmem:[#allocation10 + $0x84] sm:$0xf]
        %v1626 = vld [vmem:[#allocation10 + $0x88] sm:$0xf]
        %v1627 = vld [vmem:[#allocation10 + $0x8c] sm:$0xf]
        %v1628 = vld [vmem:[#allocation10 + $0x90] sm:$0xf]
        %v1629 = vld [vmem:[#allocation10 + $0x94] sm:$0xf]
        %v1630 = vld [vmem:[#allocation10 + $0x98] sm:$0xf]
        %v1631 = vld [vmem:[#allocation10 + $0x9c] sm:$0xf]
        %v1632 = vld [vmem:[#allocation10 + $0xa0] sm:$0xf]
        %v1633 = vld [vmem:[#allocation10 + $0xa4] sm:$0xf]
        %v1634 = vld [vmem:[#allocation10 + $0xa8] sm:$0xf]
        %v1635 = vld [vmem:[#allocation10 + $0xac] sm:$0xf]
        %v1636 = vld [vmem:[#allocation10 + $0xb0] sm:$0xf]
        %v1637 = vld [vmem:[#allocation10 + $0xb4] sm:$0xf]
        %v1638 = vld [vmem:[#allocation10 + $0xb8] sm:$0xf]
        %v1639 = vld [vmem:[#allocation10 + $0xbc] sm:$0xf]
        %v1640 = vld [vmem:[#allocation10 + $0xc0] sm:$0xf]
        %v1641 = vld [vmem:[#allocation10 + $0xc4] sm:$0xf]
        %v1642 = vld [vmem:[#allocation10 + $0xc8] sm:$0xf]
        %v1643 = vld [vmem:[#allocation10 + $0xcc] sm:$0xf]
        %v1644 = vld [vmem:[#allocation10 + $0xd0] sm:$0xf]
        %v1645 = vld [vmem:[#allocation10 + $0xd4] sm:$0xf]
        %v1646 = vld [vmem:[#allocation10 + $0xd8] sm:$0xf]
        %v1647 = vld [vmem:[#allocation10 + $0xdc] sm:$0xf]
        %v1648 = vld [vmem:[#allocation10 + $0xe0] sm:$0xf]
        %v1649 = vld [vmem:[#allocation10 + $0xe4] sm:$0xf]
        %v1650 = vld [vmem:[#allocation10 + $0xe8] sm:$0xf]
        %v1651 = vld [vmem:[#allocation10 + $0xec] sm:$0xf]
        %v1652 = vld [vmem:[#allocation10 + $0xf0] sm:$0xf]
        %v1653 = vld [vmem:[#allocation10 + $0xf4] sm:$0xf]
        %v1654 = vld [vmem:[#allocation10 + $0xf8] sm:$0xf]
        %v1655 = vld [vmem:[#allocation10 + $0xfc] sm:$0xf]
        %v1720 = vunpack.c.l.b16 %v1592
        %v1721 = vunpack.c.l.b16 %v1593
        %v1722 = vunpack.c.l.b16 %v1594
        %v1723 = vunpack.c.l.b16 %v1595
        %v1724 = vunpack.c.l.b16 %v1596
        %v1725 = vunpack.c.l.b16 %v1597
        %v1726 = vunpack.c.l.b16 %v1598
        %v1727 = vunpack.c.l.b16 %v1599
        %v1728 = vunpack.c.l.b16 %v1600
        %v1729 = vunpack.c.l.b16 %v1601
        %v1730 = vunpack.c.l.b16 %v1602
        %v1731 = vunpack.c.l.b16 %v1603
        %v1732 = vunpack.c.l.b16 %v1604
        %v1733 = vunpack.c.l.b16 %v1605
        %v1734 = vunpack.c.l.b16 %v1606
        %v1735 = vunpack.c.l.b16 %v1607
        %v1736 = vunpack.c.l.b16 %v1608
        %v1737 = vunpack.c.l.b16 %v1609
        %v1738 = vunpack.c.l.b16 %v1610
        %v1739 = vunpack.c.l.b16 %v1611
        %v1740 = vunpack.c.l.b16 %v1612
        %v1741 = vunpack.c.l.b16 %v1613
        %v1742 = vunpack.c.l.b16 %v1614
        %v1743 = vunpack.c.l.b16 %v1615
        %v1744 = vunpack.c.l.b16 %v1616
        %v1745 = vunpack.c.l.b16 %v1617
        %v1746 = vunpack.c.l.b16 %v1618
        %v1747 = vunpack.c.l.b16 %v1619
        %v1748 = vunpack.c.l.b16 %v1620
        %v1749 = vunpack.c.l.b16 %v1621
        %v1750 = vunpack.c.l.b16 %v1622
        %v1751 = vunpack.c.l.b16 %v1623
        %v1752 = vunpack.c.l.b16 %v1624
        %v1753 = vunpack.c.l.b16 %v1625
        %v1754 = vunpack.c.l.b16 %v1626
        %v1755 = vunpack.c.l.b16 %v1627
        %v1756 = vunpack.c.l.b16 %v1628
        %v1757 = vunpack.c.l.b16 %v1629
        %v1758 = vunpack.c.l.b16 %v1630
        %v1759 = vunpack.c.l.b16 %v1631
        %v1760 = vunpack.c.l.b16 %v1632
        %v1761 = vunpack.c.l.b16 %v1633
        %v1762 = vunpack.c.l.b16 %v1634
        %v1763 = vunpack.c.l.b16 %v1635
        %v1764 = vunpack.c.l.b16 %v1636
        %v1765 = vunpack.c.l.b16 %v1637
        %v1766 = vunpack.c.l.b16 %v1638
        %v1767 = vunpack.c.l.b16 %v1639
        %v1768 = vunpack.c.l.b16 %v1640
        %v1769 = vunpack.c.l.b16 %v1641
        %v1770 = vunpack.c.l.b16 %v1642
        %v1771 = vunpack.c.l.b16 %v1643
        %v1772 = vunpack.c.l.b16 %v1644
        %v1773 = vunpack.c.l.b16 %v1645
        %v1774 = vunpack.c.l.b16 %v1646
        %v1775 = vunpack.c.l.b16 %v1647
        %v1776 = vunpack.c.l.b16 %v1648
        %v1777 = vunpack.c.l.b16 %v1649
        %v1778 = vunpack.c.l.b16 %v1650
        %v1779 = vunpack.c.l.b16 %v1651
        %v1780 = vunpack.c.l.b16 %v1652
        %v1781 = vunpack.c.l.b16 %v1653
        %v1782 = vunpack.c.l.b16 %v1654
        %v1783 = vunpack.c.l.b16 %v1655
        %v1784 = vpack.c.b16 %v1721, %v1720
        %v1785 = vpack.c.b16 %v1723, %v1722
        %v1786 = vpack.c.b16 %v1725, %v1724
        %v1787 = vpack.c.b16 %v1727, %v1726
        %v1788 = vpack.c.b16 %v1729, %v1728
        %v1789 = vpack.c.b16 %v1731, %v1730
        %v1790 = vpack.c.b16 %v1733, %v1732
        %v1791 = vpack.c.b16 %v1735, %v1734
        %v1792 = vpack.c.b16 %v1737, %v1736
        %v1793 = vpack.c.b16 %v1739, %v1738
        %v1794 = vpack.c.b16 %v1741, %v1740
        %v1795 = vpack.c.b16 %v1743, %v1742
        %v1796 = vpack.c.b16 %v1745, %v1744
        %v1797 = vpack.c.b16 %v1747, %v1746
        %v1798 = vpack.c.b16 %v1749, %v1748
        %v1799 = vpack.c.b16 %v1751, %v1750
        %v1800 = vpack.c.b16 %v1753, %v1752
        %v1801 = vpack.c.b16 %v1755, %v1754
        %v1802 = vpack.c.b16 %v1757, %v1756
        %v1803 = vpack.c.b16 %v1759, %v1758
        %v1804 = vpack.c.b16 %v1761, %v1760
        %v1805 = vpack.c.b16 %v1763, %v1762
        %v1806 = vpack.c.b16 %v1765, %v1764
        %v1807 = vpack.c.b16 %v1767, %v1766
        %v1808 = vpack.c.b16 %v1769, %v1768
        %v1809 = vpack.c.b16 %v1771, %v1770
        %v1810 = vpack.c.b16 %v1773, %v1772
        %v1811 = vpack.c.b16 %v1775, %v1774
        %v1812 = vpack.c.b16 %v1777, %v1776
        %v1813 = vpack.c.b16 %v1779, %v1778
        %v1814 = vpack.c.b16 %v1781, %v1780
        %v1815 = vpack.c.b16 %v1783, %v1782
        %1848 = vmatprep.subr.bf16.mxu0 0
        %1849 = vmatpush1.bf16.msra.mxu0 %v1784
        %1850 = vmatprep.subr.bf16.mxu0 0
        %1851 = vmatpush1.bf16.msra.mxu0 %v1785
        %1852 = vmatprep.subr.bf16.mxu0 0
        %1853 = vmatpush1.bf16.msra.mxu0 %v1786
        %1854 = vmatprep.subr.bf16.mxu0 0
        %1855 = vmatpush1.bf16.msra.mxu0 %v1787
        %1856 = vmatprep.subr.bf16.mxu0 0
        %1857 = vmatpush1.bf16.msra.mxu0 %v1788
        %1858 = vmatprep.subr.bf16.mxu0 0
        %1859 = vmatpush1.bf16.msra.mxu0 %v1789
        %1860 = vmatprep.subr.bf16.mxu0 0
        %1861 = vmatpush1.bf16.msra.mxu0 %v1790
        %1862 = vmatprep.subr.bf16.mxu0 0
        %1863 = vmatpush1.bf16.msra.mxu0 %v1791
        %1864 = vmatprep.subr.bf16.mxu0 0
        %1865 = vmatpush1.bf16.msra.mxu0 %v1792
        %1866 = vmatprep.subr.bf16.mxu0 0
        %1867 = vmatpush1.bf16.msra.mxu0 %v1793
        %1868 = vmatprep.subr.bf16.mxu0 0
        %1869 = vmatpush1.bf16.msra.mxu0 %v1794
        %1870 = vmatprep.subr.bf16.mxu0 0
        %1871 = vmatpush1.bf16.msra.mxu0 %v1795
        %1872 = vmatprep.subr.bf16.mxu0 0
        %1873 = vmatpush1.bf16.msra.mxu0 %v1796
        %1874 = vmatprep.subr.bf16.mxu0 0
        %1875 = vmatpush1.bf16.msra.mxu0 %v1797
        %1876 = vmatprep.subr.bf16.mxu0 0
        %1877 = vmatpush1.bf16.msra.mxu0 %v1798
        %1878 = vmatprep.subr.bf16.mxu0 0
        %1879 = vmatpush1.bf16.msra.mxu0 %v1799
        %1880 = vmatprep.mubr.bf16.mxu0 %v1589
        %1881 = vmatmul.mubr.bf16.gmra.mrb[0].mxu0 %v1588
        %v1882 = vpop.f32.mrb[0].mxu0
        %v1883 = vadd.f32 0.0, %v1882
        %v1884 = vpop.f32.mrb[0].mxu0
        %v1885 = vpop.f32.mrb[0].mxu0
        %v1886 = vadd.f32 0.0, %v1885
        %v1887 = vpop.f32.mrb[0].mxu0
        %1888 = vdwg.mxu0
        %1889 = vmatprep.subr.bf16.mxu0 0
        %1890 = vmatpush1.bf16.msra.mxu0 %v1800
        %1891 = vmatprep.subr.bf16.mxu0 0
        %1892 = vmatpush1.bf16.msra.mxu0 %v1801
        %1893 = vmatprep.subr.bf16.mxu0 0
        %1894 = vmatpush1.bf16.msra.mxu0 %v1802
        %1895 = vmatprep.subr.bf16.mxu0 0
        %1896 = vmatpush1.bf16.msra.mxu0 %v1803
        %1897 = vmatprep.subr.bf16.mxu0 0
        %1898 = vmatpush1.bf16.msra.mxu0 %v1804
        %1899 = vmatprep.subr.bf16.mxu0 0
        %1900 = vmatpush1.bf16.msra.mxu0 %v1805
        %1901 = vmatprep.subr.bf16.mxu0 0
        %1902 = vmatpush1.bf16.msra.mxu0 %v1806
        %1903 = vmatprep.subr.bf16.mxu0 0
        %1904 = vmatpush1.bf16.msra.mxu0 %v1807
        %1905 = vmatprep.subr.bf16.mxu0 0
        %1906 = vmatpush1.bf16.msra.mxu0 %v1808
        %1907 = vmatprep.subr.bf16.mxu0 0
        %1908 = vmatpush1.bf16.msra.mxu0 %v1809
        %1909 = vmatprep.subr.bf16.mxu0 0
        %1910 = vmatpush1.bf16.msra.mxu0 %v1810
        %1911 = vmatprep.subr.bf16.mxu0 0
        %1912 = vmatpush1.bf16.msra.mxu0 %v1811
        %1913 = vmatprep.subr.bf16.mxu0 0
        %1914 = vmatpush1.bf16.msra.mxu0 %v1812
        %1915 = vmatprep.subr.bf16.mxu0 0
        %1916 = vmatpush1.bf16.msra.mxu0 %v1813
        %1917 = vmatprep.subr.bf16.mxu0 0
        %1918 = vmatpush1.bf16.msra.mxu0 %v1814
        %1919 = vmatprep.subr.bf16.mxu0 0
        %1920 = vmatpush1.bf16.msra.mxu0 %v1815
        %1921 = vmatprep.mubr.bf16.mxu0 %v1591
        %1922 = vmatmul.mubr.bf16.gmra.mrb[0].mxu0 %v1590
        %v1923 = vpop.f32.mrb[0].mxu0
        %v1924 = vadd.f32 %v1883, %v1923
        %v1925 = vpop.f32.mrb[0].mxu0
        %v1926 = vpop.f32.mrb[0].mxu0
        %v1927 = vadd.f32 %v1886, %v1926
        %v1928 = vpop.f32.mrb[0].mxu0
        %1929 = vdwg.mxu0
        %v1930 = vpack.c.bf16 %v1927, %v1924
        %v1931 = vld [vmem:[%s6] sm:$0x1]
        %v1933 = vpack.i.b16 %v1931, %v1931
        %v1935 = vlaneseq
        %v1936 = vshrl.u32 %v1935, 7
        %v1937 = vsub.s32 0, %v1936
        %v1938 = vrot.slane %v1933, %v1937
        %v1939 = vadd.bf16 %v1930, %v1938
        %v1940 = vmax.bf16 %v1939, 0
        %v1941 = vld [vmem:[%s7] sm:$0xf]
        %v1942 = vld [vmem:[%s7 + $0x4] sm:$0xf]
        %v1943 = vld [vmem:[%s7 + $0x8] sm:$0xf]
        %v1944 = vld [vmem:[%s7 + $0xc] sm:$0xf]
        %v1945 = vld [vmem:[%s7 + $0x10] sm:$0xf]
        %v1946 = vld [vmem:[%s7 + $0x14] sm:$0xf]
        %v1947 = vld [vmem:[%s7 + $0x18] sm:$0xf]
        %v1948 = vld [vmem:[%s7 + $0x1c] sm:$0xf]
        %v1949 = vld [vmem:[%s7 + $0x20] sm:$0xf]
        %v1950 = vld [vmem:[%s7 + $0x24] sm:$0xf]
        %v1951 = vld [vmem:[%s7 + $0x28] sm:$0xf]
        %v1952 = vld [vmem:[%s7 + $0x2c] sm:$0xf]
        %v1953 = vld [vmem:[%s7 + $0x30] sm:$0xf]
        %v1954 = vld [vmem:[%s7 + $0x34] sm:$0xf]
        %v1955 = vld [vmem:[%s7 + $0x38] sm:$0xf]
        %v1956 = vld [vmem:[%s7 + $0x3c] sm:$0xf]
        %v1973 = vunpack.c.l.b16 %v1941
        %v1974 = vunpack.c.l.b16 %v1942
        %v1975 = vunpack.c.l.b16 %v1943
        %v1976 = vunpack.c.l.b16 %v1944
        %v1977 = vunpack.c.l.b16 %v1945
        %v1978 = vunpack.c.l.b16 %v1946
        %v1979 = vunpack.c.l.b16 %v1947
        %v1980 = vunpack.c.l.b16 %v1948
        %v1981 = vunpack.c.l.b16 %v1949
        %v1982 = vunpack.c.l.b16 %v1950
        %v1983 = vunpack.c.l.b16 %v1951
        %v1984 = vunpack.c.l.b16 %v1952
        %v1985 = vunpack.c.l.b16 %v1953
        %v1986 = vunpack.c.l.b16 %v1954
        %v1987 = vunpack.c.l.b16 %v1955
        %v1988 = vunpack.c.l.b16 %v1956
        %v1989 = vpack.c.b16 %v1974, %v1973
        %v1990 = vpack.c.b16 %v1976, %v1975
        %v1991 = vpack.c.b16 %v1978, %v1977
        %v1992 = vpack.c.b16 %v1980, %v1979
        %v1993 = vpack.c.b16 %v1982, %v1981
        %v1994 = vpack.c.b16 %v1984, %v1983
        %v1995 = vpack.c.b16 %v1986, %v1985
        %v1996 = vpack.c.b16 %v1988, %v1987
        %2005 = vmatprep.subr.bf16.mxu0 0
        %2006 = vmatpush1.bf16.msra.mxu0 %v1989
        %2007 = vmatprep.subr.bf16.mxu0 0
        %2008 = vmatpush1.bf16.msra.mxu0 %v1990
        %2009 = vmatprep.subr.bf16.mxu0 0
        %2010 = vmatpush1.bf16.msra.mxu0 %v1991
        %2011 = vmatprep.subr.bf16.mxu0 0
        %2012 = vmatpush1.bf16.msra.mxu0 %v1992
        %2013 = vmatprep.subr.bf16.mxu0 0
        %2014 = vmatpush1.bf16.msra.mxu0 %v1993
        %2015 = vmatprep.subr.bf16.mxu0 0
        %2016 = vmatpush1.bf16.msra.mxu0 %v1994
        %2017 = vmatprep.subr.bf16.mxu0 0
        %2018 = vmatpush1.bf16.msra.mxu0 %v1995
        %2019 = vmatprep.subr.bf16.mxu0 0
        %2020 = vmatpush1.bf16.msra.mxu0 %v1996
        %2021 = vmatprep.subr.bf16.mxu0 0
        %2022 = vmatpush1.bf16.msra.mxu0 0
        %2023 = vmatprep.subr.bf16.mxu0 0
        %2024 = vmatpush1.bf16.msra.mxu0 0
        %2025 = vmatprep.subr.bf16.mxu0 0
        %2026 = vmatpush1.bf16.msra.mxu0 0
        %2027 = vmatprep.subr.bf16.mxu0 0
        %2028 = vmatpush1.bf16.msra.mxu0 0
        %2029 = vmatprep.subr.bf16.mxu0 0
        %2030 = vmatpush1.bf16.msra.mxu0 0
        %2031 = vmatprep.subr.bf16.mxu0 0
        %2032 = vmatpush1.bf16.msra.mxu0 0
        %2033 = vmatprep.subr.bf16.mxu0 0
        %2034 = vmatpush1.bf16.msra.mxu0 0
        %2035 = vmatprep.subr.bf16.mxu0 0
        %2036 = vmatpush1.bf16.msra.mxu0 0
        %2037 = vmatprep.mubr.bf16.mxu0 0
        %2038 = vmatmul.mubr.bf16.gmra.mrb[0].mxu0 %v1940
        %v2039 = vpop.f32.mrb[0].mxu0
        %v2040 = vadd.f32 0.0, %v2039
        %v2041 = vpop.f32.mrb[0].mxu0
        %v2042 = vpop.f32.mrb[0].mxu0
        %v2043 = vadd.f32 0.0, %v2042
        %v2044 = vpop.f32.mrb[0].mxu0
        %2045 = vdwg.mxu0
        %v2046 = vpack.c.bf16 %v2043, %v2040
        %v2047 = vld [vmem:[%s8] sm:$0x1]
        %v2049 = vpack.i.b16 %v2047, %v2047
        %v2051 = vlaneseq
        %v2052 = vshrl.u32 %v2051, 7
        %v2053 = vsub.s32 0, %v2052
        %v2054 = vrot.slane %v2049, %v2053
        %v2055 = vadd.bf16 %v2046, %v2054
        %v2057 = vunpack.c.l.b16 %v2055
        %v2058 = vunpack.c.h.b16 %v2055
        %v2059 = vpack.c.b16 %v2057, %v2057
        %v2060 = vpack.c.b16 %v2058, %v2058
        %2063 = vst [vmem:[%s393] sm:$0xf] %v2059
        %2064 = vst [vmem:[%s393 + $0x4] sm:$0xf] %v2060
        %s2065 = sand.u32 %s228, 1
        %s2066 = scalar_lea.sflag [#allocation4], %s2065
        %s2067 = sand.u32 %s228, 1
        %s2068 = smul.addr %s2067, 8
        %s2069 = scalar_lea.vmem [#allocation11], %s2068
        // Predicated region
        $region77: #{tpu_custom_call.1} parent=55 // pred_check
          %p2070 = pneg %p238
        $region78: #{tpu_custom_call.1} parent=55 // pred_check_branch
          %2072 = sbr.rel (%p2070) target = $region80
        $region79: #{tpu_custom_call.1} parent=55 // pred_region
          %s2073 = smul.u32 2, %s26
          %s2075 = ssub.s32 128, 128
          %2076 = vsyncadd %s2066, %s2075
          %s2077 = smul.addr %s2073, 64
          %s2078 = scalar_lea.hbm %s9, %s2077
          %s2079 = sshll.u32 %s2069, 4
          %s2080 = int_to_ptr.vmem [resolvable:$true] %s2079
          %2085 = dma.vmem_to_hbm [thread:$0]  %s2080, 128, %s2078, %s2066, 64, 64, 4
        $region80: #{tpu_custom_call.1} parent=55 // pred_fallthru
          _
      $region56: #{tpu_custom_call.1} parent=5 // pred_fallthru
        _
      %p2086 = scmp.le.s32.totalorder 2, %s21
      // Predicated region
      $region81: #{tpu_custom_call.1} parent=5 // pred_check
        %p2087 = pneg %p2086
      $region82: #{tpu_custom_call.1} parent=5 // pred_check_branch
        %2089 = sbr.rel (%p2087) target = $region84
      $region83: #{tpu_custom_call.1} parent=5 // pred_region
        %s2090 = ssub.s32 %s21, 2
        // Predicated region
        $region85: #{tpu_custom_call.1} parent=83 // pred_check
          %p2091 = pneg %p244
        $region86: #{tpu_custom_call.1} parent=83 // pred_check_branch
          %2093 = sbr.rel (%p2091) target = $region88
        $region87: #{tpu_custom_call.1} parent=83 // pred_region
          %s2094 = sand.u32 %s229, 1
          %s2095 = scalar_lea.sflag [#allocation4], %s2094
          %s2096 = sand.u32 %s229, 1
          %s2097 = smul.addr %s2096, 8
          %s2098 = scalar_lea.vmem [#allocation11], %s2097
          %2099 = dma.done %s2095, 128
        $region88: #{tpu_custom_call.1} parent=83 // pred_fallthru
          _
      $region84: #{tpu_custom_call.1} parent=5 // pred_fallthru
        _
    $region6: #{tpu_custom_call.1} parent=1 // loop_footer
      %s25 = sadd.s32 1, %s21
    $region7: #{tpu_custom_call.1} parent=1 // loop_footer_branch
      %20 = sbr.rel target = $region3
    $region8: #{tpu_custom_call.1} parent=1 // loop_exit
      _
    %2100 = vsyncpa [#allocation3], 1
    %s2101 = scalar_lea.sflag [#allocation3], 1
    %2102 = vsyncpa %s2101, 1
    %2103 = vsyncpa [#allocation6], 1
    %2104 = vsyncpa [#allocation9], 1
    %2105 = vsyncpa [#allocation4], 1
    %s2106 = scalar_lea.sflag [#allocation4], 1
    %2107 = vsyncpa %s2106, 1

</llo_original>
